<compile_context>
chip_gen: v6e
topology: v6e:2x2x1
jax: 0.10.0
libtpu: 0.0.40
codegen_flags: <defaults>
</compile_context>

<pallas_src>
import functools
import math

import jax
import jax.numpy as jnp
from jax.experimental import pallas as pl
from jax.experimental.pallas import tpu as pltpu


def _round_up(x, m):
    return (x + m - 1) // m * m


def _nbytes(shape, dtype):
    return math.prod(shape) * jnp.dtype(dtype).itemsize


def _pick_row_tile(n_pad):
    """Largest of {512, 256, 128} that divides n_pad and leaves >=2 row blocks
    (so the 'parallel' grid axis can use both v7x TensorCores)."""
    for t in (512, 256, 128):
        if n_pad % t == 0 and n_pad // t >= 2:
            return t
    return min(n_pad, 128)  # n_pad is always a multiple of 128


def _compiler_params(resident_bytes):
    # 2x for double-buffering of the tiled operands + headroom for compiler scratch.
    limit = int(2 * resident_bytes + (8 << 20))
    limit = max(limit, 16 << 20)
    limit = min(limit, 64 << 20)  # v7x per-TC physical VMEM ceiling
    return pltpu.CompilerParams(
        dimension_semantics=("parallel",),
        vmem_limit_bytes=limit,
    )


# ---------------------------------------------------------------------------
# Kernel bodies
# ---------------------------------------------------------------------------
def _epilogue(h, b, activation, out_valid):
    """f32 epilogue: bias + (relu | masked log_softmax over the first out_valid lanes)."""
    h = h + b
    if activation == "relu":
        return jnp.maximum(h, 0.0)
    if activation == "log_softmax":
        col = jax.lax.broadcasted_iota(jnp.int32, h.shape, 1)
        valid = col < out_valid
        hm = jnp.where(valid, h, jnp.asarray(-1e30, h.dtype))
        m = jnp.max(hm, axis=1, keepdims=True)
        z = hm - m
        lse = jnp.log(jnp.sum(jnp.where(valid, jnp.exp(z), 0.0), axis=1, keepdims=True))
        return jnp.where(valid, z - lse, 0.0)
    return h


def _agg_xform_kernel(a_ref, h_ref, w_ref, b_ref, o_ref, *, activation, out_valid):
    """Row-block i: o = epilogue( (A[i,:] @ H) @ W + b ).  Used when f_in <= f_out."""
    t = jnp.dot(a_ref[...], h_ref[...], preferred_element_type=jnp.float32)
    h = jnp.dot(t.astype(jnp.bfloat16), w_ref[...], preferred_element_type=jnp.float32)
    o_ref[...] = _epilogue(h, b_ref[...], activation, out_valid).astype(o_ref.dtype)


def _xform_kernel(h_ref, w_ref, o_ref):
    """Row-block i: o = H[i,:] @ W  (no bias/activation; feeds the aggregation call)."""
    o_ref[...] = jnp.dot(
        h_ref[...], w_ref[...], preferred_element_type=jnp.float32
    ).astype(o_ref.dtype)


def _agg_kernel(a_ref, t_ref, b_ref, o_ref, *, activation, out_valid):
    """Row-block i: o = epilogue( A[i,:] @ T + b ).  Used when f_in > f_out."""
    h = jnp.dot(a_ref[...], t_ref[...], preferred_element_type=jnp.float32)
    o_ref[...] = _epilogue(h, b_ref[...], activation, out_valid).astype(o_ref.dtype)


# ---------------------------------------------------------------------------
# pallas_call builders (row-block "parallel" grid over nodes)
# ---------------------------------------------------------------------------
def _call_agg_xform(a_p, h, w_p, b_p, activation, out_valid, tm):
    n_pad = a_p.shape[0]
    f_in_pad = h.shape[1]
    f_out_pad = w_p.shape[1]
    out_dtype = jnp.float32 if activation == "log_softmax" else jnp.bfloat16
    resident = (
        2 * _nbytes((tm, n_pad), jnp.bfloat16)          # A row block (double-buffered)
        + 2 * _nbytes((n_pad, f_in_pad), jnp.bfloat16)  # H (resident)
        + _nbytes((f_in_pad, f_out_pad), jnp.bfloat16)  # W
        + _nbytes((1, f_out_pad), jnp.float32)          # b
        + 2 * _nbytes((tm, f_out_pad), out_dtype)       # out block
    )
    kernel = functools.partial(
        _agg_xform_kernel, activation=activation, out_valid=out_valid
    )
    return pl.pallas_call(
        kernel,
        out_shape=jax.ShapeDtypeStruct((n_pad, f_out_pad), out_dtype),
        grid=(n_pad // tm,),
        in_specs=[
            pl.BlockSpec((tm, n_pad), lambda i: (i, 0)),        # A row block
            pl.BlockSpec((n_pad, f_in_pad), lambda i: (0, 0)),  # H full (resident)
            pl.BlockSpec((f_in_pad, f_out_pad), lambda i: (0, 0)),
            pl.BlockSpec((1, f_out_pad), lambda i: (0, 0)),
        ],
        out_specs=pl.BlockSpec((tm, f_out_pad), lambda i: (i, 0)),
        compiler_params=_compiler_params(resident),
    )(a_p, h, w_p, b_p)


def _call_xform(h, w_p, tm):
    n_pad, f_in_pad = h.shape
    f_out_pad = w_p.shape[1]
    resident = (
        2 * _nbytes((tm, f_in_pad), jnp.bfloat16)
        + _nbytes((f_in_pad, f_out_pad), jnp.bfloat16)
        + 2 * _nbytes((tm, f_out_pad), jnp.bfloat16)
    )
    return pl.pallas_call(
        _xform_kernel,
        out_shape=jax.ShapeDtypeStruct((n_pad, f_out_pad), jnp.bfloat16),
        grid=(n_pad // tm,),
        in_specs=[
            pl.BlockSpec((tm, f_in_pad), lambda i: (i, 0)),
            pl.BlockSpec((f_in_pad, f_out_pad), lambda i: (0, 0)),
        ],
        out_specs=pl.BlockSpec((tm, f_out_pad), lambda i: (i, 0)),
        compiler_params=_compiler_params(resident),
    )(h, w_p)


def _call_agg(a_p, t, b_p, activation, out_valid, tm):
    n_pad = a_p.shape[0]
    f_out_pad = t.shape[1]
    out_dtype = jnp.float32 if activation == "log_softmax" else jnp.bfloat16
    resident = (
        2 * _nbytes((tm, n_pad), jnp.bfloat16)
        + 2 * _nbytes((n_pad, f_out_pad), jnp.bfloat16)
        + _nbytes((1, f_out_pad), jnp.float32)
        + 2 * _nbytes((tm, f_out_pad), out_dtype)
    )
    kernel = functools.partial(_agg_kernel, activation=activation, out_valid=out_valid)
    return pl.pallas_call(
        kernel,
        out_shape=jax.ShapeDtypeStruct((n_pad, f_out_pad), out_dtype),
        grid=(n_pad // tm,),
        in_specs=[
            pl.BlockSpec((tm, n_pad), lambda i: (i, 0)),         # A row block
            pl.BlockSpec((n_pad, f_out_pad), lambda i: (0, 0)),  # H @ W (resident)
            pl.BlockSpec((1, f_out_pad), lambda i: (0, 0)),
        ],
        out_specs=pl.BlockSpec((tm, f_out_pad), lambda i: (i, 0)),
        compiler_params=_compiler_params(resident),
    )(a_p, t, b_p)


# ---------------------------------------------------------------------------
# Full GCN forward on top of the Pallas calls
# ---------------------------------------------------------------------------
def gcn_pallas_forward(a_hat, features, params, out_size):
    """Runs the GCN layer stack with Pallas kernels. Returns [N, out_size] log-probs."""
    n, f0 = features.shape
    n_pad = _round_up(max(n, 128), 128)  # lane dim of A AND the contraction dim of A@H
    tm = _pick_row_tile(n_pad)

    # Pad & cast once (bf16 halves A/H/W bytes; MXU accumulates in f32).
    a_p = jnp.pad(a_hat, ((0, n_pad - n), (0, n_pad - n))).astype(jnp.bfloat16)
    f0_pad = _round_up(max(f0, 128), 128)
    h = jnp.pad(features, ((0, n_pad - n), (0, f0_pad - f0))).astype(jnp.bfloat16)

    num_layers = len(params)
    for l, (w, b) in enumerate(params):
        f_in, f_out = int(w.shape[0]), int(w.shape[1])
        f_in_pad = h.shape[1]
        f_out_pad = _round_up(max(f_out, 128), 128)
        w_p = jnp.pad(
            w, ((0, f_in_pad - f_in), (0, f_out_pad - f_out))
        ).astype(jnp.bfloat16)
        b_p = jnp.pad(b, (0, f_out_pad - f_out)).astype(jnp.float32).reshape(1, f_out_pad)

        last = l == num_layers - 1
        activation = "log_softmax" if last else "relu"
        out_valid = out_size if last else f_out_pad

        if f_in <= f_out:
            # widening / square: aggregate first -> fewer MACs, one call
            h = _call_agg_xform(a_p, h, w_p, b_p, activation, out_valid, tm)
        else:
            # narrowing: transform first so the N x N aggregation runs at width f_out
            t = _call_xform(h, w_p, tm)
            h = _call_agg(a_p, t, b_p, activation, out_valid, tm)
        # dropout(training=False) is the identity -> no-op in eval mode

    return h[:n, :out_size]


# ---------------------------------------------------------------------------
# Plain-JAX glue: symmetric normalization of adjacency with self-loops
# (PyG GCNConv: scatter-add edge weights + add_remaining_self_loops(fill=1))
# ---------------------------------------------------------------------------
def normalized_adjacency(edge_index, num_nodes):
    src, dst = edge_index[0], edge_index[1]
    # scatter-ADD off-diagonal edges (duplicate edges accumulate, like PyG's scatter);
    # explicit self-loops are dropped and replaced by a single weight-1 loop per node.
    w = jnp.where(src == dst, 0.0, 1.0).astype(jnp.float32)
    adj = jnp.zeros((num_nodes, num_nodes), jnp.float32).at[dst, src].add(w)
    adj = adj + jnp.eye(num_nodes, dtype=jnp.float32)
    deg = jnp.sum(adj, axis=1)
    d_inv_sqrt = jnp.where(deg > 0, jax.lax.rsqrt(deg), 0.0)
    return d_inv_sqrt[:, None] * adj * d_inv_sqrt[None, :]


# ---------------------------------------------------------------------------
# Model: deterministic parameter init + forward pass
# ---------------------------------------------------------------------------
def init_gcn_params(key, in_size, hid_size, out_size, layers):
    sizes = [(in_size, hid_size)]
    sizes += [(hid_size, hid_size)] * (layers - 2)
    sizes += [(hid_size, out_size)]
    params = []
    for (fi, fo) in sizes:
        key, kw = jax.random.split(key)
        scale = jnp.sqrt(6.0 / (fi + fo)).astype(jnp.float32)  # glorot-uniform
        w = jax.random.uniform(kw, (fi, fo), jnp.float32, -scale, scale)
        b = jnp.zeros((fo,), jnp.float32)
        params.append((w, b))
    return params


@functools.partial(jax.jit, static_argnames=("num_nodes", "out_size"))
def gcn_forward(edge_index, features, params, num_nodes, out_size):
    """GCN.forward(edge, features) in eval mode (dropout = identity)."""
    a_hat = normalized_adjacency(edge_index, num_nodes)
    return gcn_pallas_forward(a_hat, features, params, out_size)


def gcn_forward_ref(edge_index, features, params, num_nodes):
    """Pure-JAX f32 reference (same math, no Pallas) for a correctness check."""
    a_hat = normalized_adjacency(edge_index, num_nodes)
    h = features
    for (w, b) in params[:-1]:
        h = jnp.maximum(a_hat @ (h @ w) + b[None, :], 0.0)
    w, b = params[-1]
    h = a_hat @ (h @ w) + b[None, :]
    return jax.nn.log_softmax(h, axis=1)


# ---------------------------------------------------------------------------
if __name__ == "__main__":
    key = jax.random.PRNGKey(0)

    num_nodes = 200          # -> n_pad = 256, row tile 128, 2-block parallel grid
    num_edges = 800
    in_size, hid_size, out_size, layers = 16, 32, 8, 3

    k_feat, k_src, k_dst, k_param = jax.random.split(key, 4)
    features = jax.random.normal(k_feat, (num_nodes, in_size), jnp.float32)
    src = jax.random.randint(k_src, (num_edges,), 0, num_nodes, jnp.int32)
    dst = jax.random.randint(k_dst, (num_edges,), 0, num_nodes, jnp.int32)
    edge_index = jnp.stack([src, dst], axis=0)  # [2, E]

    params = init_gcn_params(k_param, in_size, hid_size, out_size, layers)

    out = gcn_forward(edge_index, features, params, num_nodes, out_size)
    out = jax.block_until_ready(out)

    # sanity 1: shape and log_softmax normalization (rows sum to ~1 in prob space)
    assert out.shape == (num_nodes, out_size)
    row_prob_sums = jnp.exp(out).sum(axis=1)
    assert bool(jnp.allclose(row_prob_sums, 1.0, atol=1e-3))

    # sanity 2: matches a pure-JAX f32 reference within bf16-matmul tolerance
    ref = gcn_forward_ref(edge_index, features, params, num_nodes)
    assert bool(jnp.allclose(out, ref, atol=2e-1, rtol=2e-1))

    print("KERNEL_OK")
</pallas_src>

<mosaic_0001>
module attributes {stable_mosaic.version = 11 : i64} {
  func.func private @main(%arg0: i32) attributes {dimension_semantics = [#tpu.dimension_semantics<core_parallel>], iteration_bounds = array<i64: 2>, tpu.core_type = #tpu.core_type<sc_scalar_subcore>, window_params = []} {
    return
  }
}

module attributes {stable_mosaic.version = 11 : i64} {
  func.func private @main(%arg0: i32) attributes {dimension_semantics = [#tpu.dimension_semantics<core_parallel>], iteration_bounds = array<i64: 2>, tpu.core_type = #tpu.core_type<sc_scalar_subcore>, window_params = []} {
    return
  }
}

module attributes {stable_mosaic.version = 11 : i64} {
  func.func @_agg_xform_kernel(%arg0: i32, %arg1: memref<128x256xbf16, #tpu.memory_space<vmem>>, %arg2: memref<256x128xbf16, #tpu.memory_space<vmem>>, %arg3: memref<128x128xbf16, #tpu.memory_space<vmem>>, %arg4: memref<1x128xf32, #tpu.memory_space<vmem>>, %arg5: memref<128x128xbf16, #tpu.memory_space<vmem>>) attributes {dimension_semantics = [#tpu.dimension_semantics<parallel>], iteration_bounds = array<i64: 2>, scalar_prefetch = 0 : i64, scratch_operands = 0 : i64, tpu.core_type = #tpu.core_type<tc>, window_params = [{transform_indices = @transform_0, window_bounds = array<i64: 128, 256>}, {pipeline_mode = #tpu.pipeline_mode<synchronous>, transform_indices = @transform_1, window_bounds = array<i64: 256, 128>}, {pipeline_mode = #tpu.pipeline_mode<synchronous>, transform_indices = @transform_2, window_bounds = array<i64: 128, 128>}, {pipeline_mode = #tpu.pipeline_mode<synchronous>, transform_indices = @transform_3, window_bounds = array<i64: 1, 128>}, {transform_indices = @transform_4, window_bounds = array<i64: 128, 128>}]} {
    %c0 = arith.constant 0 : index
    %c0_0 = arith.constant 0 : index
    %0 = vector.load %arg1[%c0, %c0_0] : memref<128x256xbf16, #tpu.memory_space<vmem>>, vector<128x256xbf16>
    %c0_1 = arith.constant 0 : index
    %c0_2 = arith.constant 0 : index
    %1 = vector.load %arg2[%c0_1, %c0_2] : memref<256x128xbf16, #tpu.memory_space<vmem>>, vector<256x128xbf16>
    %cst = arith.constant dense<0.000000e+00> : vector<128x128xf32>
    %2 = tpu.matmul %0, %1, %cst {dimension_numbers = #tpu.dot_dimension_numbers<[1], [0], [0], [1], [0, 0, 1, 1], [], []>} : vector<128x256xbf16>, vector<256x128xbf16>, vector<128x128xf32> -> vector<128x128xf32>
    %3 = arith.truncf %2 : vector<128x128xf32> to vector<128x128xbf16>
    %c0_3 = arith.constant 0 : index
    %c0_4 = arith.constant 0 : index
    %4 = vector.load %arg3[%c0_3, %c0_4] : memref<128x128xbf16, #tpu.memory_space<vmem>>, vector<128x128xbf16>
    %cst_5 = arith.constant dense<0.000000e+00> : vector<128x128xf32>
    %5 = tpu.matmul %3, %4, %cst_5 {dimension_numbers = #tpu.dot_dimension_numbers<[1], [0], [0], [1], [0, 0, 1, 1], [], []>} : vector<128x128xbf16>, vector<128x128xbf16>, vector<128x128xf32> -> vector<128x128xf32>
    %c0_6 = arith.constant 0 : index
    %c0_7 = arith.constant 0 : index
    %6 = vector.load %arg4[%c0_6, %c0_7] : memref<1x128xf32, #tpu.memory_space<vmem>>, vector<1x128xf32>
    %7 = vector.broadcast %6 : vector<1x128xf32> to vector<128x128xf32>
    %8 = arith.addf %5, %7 : vector<128x128xf32>
    %cst_8 = arith.constant 0.000000e+00 : f32
    %9 = vector.broadcast %cst_8 : f32 to vector<128x128xf32>
    %10 = arith.maximumf %8, %9 : vector<128x128xf32>
    %11 = arith.truncf %10 : vector<128x128xf32> to vector<128x128xbf16>
    %c0_9 = arith.constant 0 : index
    %c0_10 = arith.constant 0 : index
    %12 = vector.load %arg5[%c0_9, %c0_10] : memref<128x128xbf16, #tpu.memory_space<vmem>>, vector<128x128xbf16>
    tpu.vector_store %arg5[%c0_9, %c0_10], %11 {strides = array<i32>} : memref<128x128xbf16, #tpu.memory_space<vmem>>, vector<128x128xbf16>,
    return
  }
  func.func @transform_0(%arg0: i32) -> (i32, i32) {
    %c0_i32 = arith.constant 0 : i32
    %c0_i32_0 = arith.constant 0 : i32
    return %arg0, %c0_i32 : i32, i32
  }
  func.func @transform_1(%arg0: i32) -> (i32, i32) {
    %c0_i32 = arith.constant 0 : i32
    %c0_i32_0 = arith.constant 0 : i32
    %c0_i32_1 = arith.constant 0 : i32
    return %c0_i32, %c0_i32_0 : i32, i32
  }
  func.func @transform_2(%arg0: i32) -> (i32, i32) {
    %c0_i32 = arith.constant 0 : i32
    %c0_i32_0 = arith.constant 0 : i32
    %c0_i32_1 = arith.constant 0 : i32
    return %c0_i32, %c0_i32_0 : i32, i32
  }
  func.func @transform_3(%arg0: i32) -> (i32, i32) {
    %c0_i32 = arith.constant 0 : i32
    %c0_i32_0 = arith.constant 0 : i32
    %c0_i32_1 = arith.constant 0 : i32
    return %c0_i32, %c0_i32_0 : i32, i32
  }
  func.func @transform_4(%arg0: i32) -> (i32, i32) {
    %c0_i32 = arith.constant 0 : i32
    %c0_i32_0 = arith.constant 0 : i32
    return %arg0, %c0_i32 : i32, i32
  }
}

module attributes {stable_mosaic.version = 11 : i64} {
  func.func @_xform_kernel(%arg0: i32, %arg1: memref<128x128xbf16, #tpu.memory_space<vmem>>, %arg2: memref<128x128xbf16, #tpu.memory_space<vmem>>, %arg3: memref<128x128xbf16, #tpu.memory_space<vmem>>) attributes {dimension_semantics = [#tpu.dimension_semantics<parallel>], iteration_bounds = array<i64: 2>, scalar_prefetch = 0 : i64, scratch_operands = 0 : i64, tpu.core_type = #tpu.core_type<tc>, window_params = [{transform_indices = @transform_0, window_bounds = array<i64: 128, 128>}, {pipeline_mode = #tpu.pipeline_mode<synchronous>, transform_indices = @transform_1, window_bounds = array<i64: 128, 128>}, {transform_indices = @transform_2, window_bounds = array<i64: 128, 128>}]} {
    %c0 = arith.constant 0 : index
    %c0_0 = arith.constant 0 : index
    %0 = vector.load %arg1[%c0, %c0_0] : memref<128x128xbf16, #tpu.memory_space<vmem>>, vector<128x128xbf16>
    %c0_1 = arith.constant 0 : index
    %c0_2 = arith.constant 0 : index
    %1 = vector.load %arg2[%c0_1, %c0_2] : memref<128x128xbf16, #tpu.memory_space<vmem>>, vector<128x128xbf16>
    %cst = arith.constant dense<0.000000e+00> : vector<128x128xf32>
    %2 = tpu.matmul %0, %1, %cst {dimension_numbers = #tpu.dot_dimension_numbers<[1], [0], [0], [1], [0, 0, 1, 1], [], []>} : vector<128x128xbf16>, vector<128x128xbf16>, vector<128x128xf32> -> vector<128x128xf32>
    %3 = arith.truncf %2 : vector<128x128xf32> to vector<128x128xbf16>
    %c0_3 = arith.constant 0 : index
    %c0_4 = arith.constant 0 : index
    %4 = vector.load %arg3[%c0_3, %c0_4] : memref<128x128xbf16, #tpu.memory_space<vmem>>, vector<128x128xbf16>
    tpu.vector_store %arg3[%c0_3, %c0_4], %3 {strides = array<i32>} : memref<128x128xbf16, #tpu.memory_space<vmem>>, vector<128x128xbf16>,
    return
  }
  func.func @transform_0(%arg0: i32) -> (i32, i32) {
    %c0_i32 = arith.constant 0 : i32
    %c0_i32_0 = arith.constant 0 : i32
    return %arg0, %c0_i32 : i32, i32
  }
  func.func @transform_1(%arg0: i32) -> (i32, i32) {
    %c0_i32 = arith.constant 0 : i32
    %c0_i32_0 = arith.constant 0 : i32
    %c0_i32_1 = arith.constant 0 : i32
    return %c0_i32, %c0_i32_0 : i32, i32
  }
  func.func @transform_2(%arg0: i32) -> (i32, i32) {
    %c0_i32 = arith.constant 0 : i32
    %c0_i32_0 = arith.constant 0 : i32
    return %arg0, %c0_i32 : i32, i32
  }
}

module attributes {stable_mosaic.version = 11 : i64} {
  func.func @_agg_kernel(%arg0: i32, %arg1: memref<128x256xbf16, #tpu.memory_space<vmem>>, %arg2: memref<256x128xbf16, #tpu.memory_space<vmem>>, %arg3: memref<1x128xf32, #tpu.memory_space<vmem>>, %arg4: memref<128x128xf32, #tpu.memory_space<vmem>>) attributes {dimension_semantics = [#tpu.dimension_semantics<parallel>], iteration_bounds = array<i64: 2>, scalar_prefetch = 0 : i64, scratch_operands = 0 : i64, tpu.core_type = #tpu.core_type<tc>, window_params = [{transform_indices = @transform_0, window_bounds = array<i64: 128, 256>}, {pipeline_mode = #tpu.pipeline_mode<synchronous>, transform_indices = @transform_1, window_bounds = array<i64: 256, 128>}, {pipeline_mode = #tpu.pipeline_mode<synchronous>, transform_indices = @transform_2, window_bounds = array<i64: 1, 128>}, {transform_indices = @transform_3, window_bounds = array<i64: 128, 128>}]} {
    %c0 = arith.constant 0 : index
    %c0_0 = arith.constant 0 : index
    %0 = vector.load %arg1[%c0, %c0_0] : memref<128x256xbf16, #tpu.memory_space<vmem>>, vector<128x256xbf16>
    %c0_1 = arith.constant 0 : index
    %c0_2 = arith.constant 0 : index
    %1 = vector.load %arg2[%c0_1, %c0_2] : memref<256x128xbf16, #tpu.memory_space<vmem>>, vector<256x128xbf16>
    %cst = arith.constant dense<0.000000e+00> : vector<128x128xf32>
    %2 = tpu.matmul %0, %1, %cst {dimension_numbers = #tpu.dot_dimension_numbers<[1], [0], [0], [1], [0, 0, 1, 1], [], []>} : vector<128x256xbf16>, vector<256x128xbf16>, vector<128x128xf32> -> vector<128x128xf32>
    %c0_3 = arith.constant 0 : index
    %c0_4 = arith.constant 0 : index
    %3 = vector.load %arg3[%c0_3, %c0_4] : memref<1x128xf32, #tpu.memory_space<vmem>>, vector<1x128xf32>
    %4 = vector.broadcast %3 : vector<1x128xf32> to vector<128x128xf32>
    %5 = arith.addf %2, %4 : vector<128x128xf32>
    %6 = tpu.iota {dimensions = array<i32: 1>} : vector<128x128xi32>
    %c8_i32 = arith.constant 8 : i32
    %7 = vector.broadcast %c8_i32 : i32 to vector<128x128xi32>
    %8 = arith.cmpi slt, %6, %7 : vector<128x128xi32>
    %cst_5 = arith.constant -1.000000e+30 : f32
    %9 = vector.broadcast %cst_5 : f32 to vector<128x128xf32>
    %10 = arith.select %8, %5, %9 : vector<128x128xi1>, vector<128x128xf32>
    %cst_6 = arith.constant dense<0xFF800000> : vector<128xf32>
    %11 = vector.multi_reduction <maximumf>, %10, %cst_6 [1] : vector<128x128xf32> to vector<128xf32>
    %12 = vector.shape_cast %11 : vector<128xf32> to vector<128x1xf32>
    %13 = vector.broadcast %12 : vector<128x1xf32> to vector<128x128xf32>
    %14 = arith.subf %10, %13 : vector<128x128xf32>
    %15 = math.exp %14 : vector<128x128xf32>
    %cst_7 = arith.constant 0.000000e+00 : f32
    %16 = vector.broadcast %cst_7 : f32 to vector<128x128xf32>
    %17 = arith.select %8, %15, %16 : vector<128x128xi1>, vector<128x128xf32>
    %cst_8 = arith.constant dense<0.000000e+00> : vector<128xf32>
    %18 = vector.multi_reduction <add>, %17, %cst_8 [1] : vector<128x128xf32> to vector<128xf32>
    %19 = vector.shape_cast %18 : vector<128xf32> to vector<128x1xf32>
    %20 = math.log %19 : vector<128x1xf32>
    %21 = vector.broadcast %20 : vector<128x1xf32> to vector<128x128xf32>
    %22 = arith.subf %14, %21 : vector<128x128xf32>
    %cst_9 = arith.constant 0.000000e+00 : f32
    %23 = vector.broadcast %cst_9 : f32 to vector<128x128xf32>
    %24 = arith.select %8, %22, %23 : vector<128x128xi1>, vector<128x128xf32>
    %c0_10 = arith.constant 0 : index
    %c0_11 = arith.constant 0 : index
    %25 = vector.load %arg4[%c0_10, %c0_11] : memref<128x128xf32, #tpu.memory_space<vmem>>, vector<128x128xf32>
    tpu.vector_store %arg4[%c0_10, %c0_11], %24 {strides = array<i32>} : memref<128x128xf32, #tpu.memory_space<vmem>>, vector<128x128xf32>,
    return
  }
  func.func @transform_0(%arg0: i32) -> (i32, i32) {
    %c0_i32 = arith.constant 0 : i32
    %c0_i32_0 = arith.constant 0 : i32
    return %arg0, %c0_i32 : i32, i32
  }
  func.func @transform_1(%arg0: i32) -> (i32, i32) {
    %c0_i32 = arith.constant 0 : i32
    %c0_i32_0 = arith.constant 0 : i32
    %c0_i32_1 = arith.constant 0 : i32
    return %c0_i32, %c0_i32_0 : i32, i32
  }
  func.func @transform_2(%arg0: i32) -> (i32, i32) {
    %c0_i32 = arith.constant 0 : i32
    %c0_i32_0 = arith.constant 0 : i32
    %c0_i32_1 = arith.constant 0 : i32
    return %c0_i32, %c0_i32_0 : i32, i32
  }
  func.func @transform_3(%arg0: i32) -> (i32, i32) {
    %c0_i32 = arith.constant 0 : i32
    %c0_i32_0 = arith.constant 0 : i32
    return %arg0, %c0_i32 : i32, i32
  }
}

</mosaic_0001>

<llo_original>
// kernel: gcn_forward.6
$region0: #{gcn_forward.6}
  #allocation0 [shape = 'u32[]', space=smem, size = 0x4, offset = 0x4, fixed_abs, tag = 'smem constant byte address 0x4 - core index']
  #allocation1 [shape = 'u32[144,128]{1,0:T(1,128)}', space=vmem, size = 0x12000, scoped, tag = 'internal scratch']
  %s0 = inlined_call_operand.vmem [shape: bf16[256,128], index: 0, kind: input, shape index: {}]
  %s1 = inlined_call_operand.vmem [shape: bf16[128,128], index: 1, kind: input, shape index: {}]
  %s2 = inlined_call_operand.vmem [shape: bf16[256,128], index: 2, kind: output, shape index: {}]
  %s3 = sld [smem:[#allocation0]]
  $region41: #{gcn_forward.6} parent=0
    _
  %s5 = ssub.s32 1, %s3
  %s6 = scalar_select 0, %s5, %s3
  loop: start=0, step=1, limit=4
  $region2: #{gcn_forward.6} parent=0 // loop_pre_header
    _
  $region3: #{gcn_forward.6} parent=0 // loop_header
    %s8 = sphi 0, %s12
    %p9 = scmp.ge.s32.totalorder %s8, 4
    %s18 = sphi 0, %s20
    %s21 = sphi 0, %s18
    %s22 = sphi 0, %s21
    %s38 = sphi 0, %s22
    %s42 = sphi 0, %s42
    %s44 = sphi 0, %s42
    %s45 = sphi 0, %s44
    %s59 = sphi 0, %s45
    %s65 = sphi 0, %s67
    %s68 = sphi 0, %s65
    %s69 = sphi 0, %s68
    %s85 = sphi 0, %s69
  $region4: #{gcn_forward.6} parent=0 // loop_header_branch
    %11 = sbr.rel (%p9) target = $region8
  $region5: #{gcn_forward.6} parent=0 // loop_body
    %s13 = ssub.s32 %s8, 1
    %s14 = ssub.s32 %s8, 2
    %s15 = sadd.s32 %s8, 1
    %s16 = ssub.s32 %s8, %s15
    %p17 = scmp.eq.s32.totalorder %s16, 0
    %s19 = sadd.s32 %s18, 1
    %s20 = scalar_select %p17, %s18, %s19
    %p23 = pneg %p17
    %p24 = scmp.eq.s32.totalorder %s8, 1
    %p25 = por %p23, %p24
    %p26 = scmp.ne.s32.totalorder %s18, %s21
    %p27 = scmp.eq.s32.totalorder %s8, 0
    %p28 = por %p26, %p27
    %p29 = scmp.ne.s32.totalorder %s18, %s21
    %p30 = scmp.eq.s32.totalorder %s13, 1
    %p31 = por %p29, %p30
    %p32 = scmp.ne.s32.totalorder %s21, %s22
    %p33 = scmp.eq.s32.totalorder %s13, 0
    %p34 = por %p32, %p33
    %p35 = scmp.ne.s32.totalorder %s21, %s22
    %p36 = scmp.eq.s32.totalorder %s14, 1
    %p37 = por %p35, %p36
    %p39 = scmp.ne.s32.totalorder %s22, %s38
    %p40 = scmp.eq.s32.totalorder %s14, 0
    %p41 = por %p39, %p40
    %s43 = sadd.s32 %s42, 1
    %p46 = scmp.eq.s32.totalorder %s8, 1
    %p47 = scmp.ne.s32.totalorder %s42, %s44
    %p48 = scmp.eq.s32.totalorder %s8, 0
    %p49 = por %p47, %p48
    %p50 = scmp.ne.s32.totalorder %s42, %s44
    %p51 = scmp.eq.s32.totalorder %s13, 1
    %p52 = por %p50, %p51
    %p53 = scmp.ne.s32.totalorder %s44, %s45
    %p54 = scmp.eq.s32.totalorder %s13, 0
    %p55 = por %p53, %p54
    %p56 = scmp.ne.s32.totalorder %s44, %s45
    %p57 = scmp.eq.s32.totalorder %s14, 1
    %p58 = por %p56, %p57
    %p60 = scmp.ne.s32.totalorder %s45, %s59
    %p61 = scmp.eq.s32.totalorder %s14, 0
    %p62 = por %p60, %p61
    %s63 = ssub.s32 %s8, %s15
    %p64 = scmp.eq.s32.totalorder %s63, 0
    %s66 = sadd.s32 %s65, 1
    %s67 = scalar_select %p64, %s65, %s66
    %p70 = pneg %p64
    %p71 = scmp.eq.s32.totalorder %s8, 1
    %p72 = por %p70, %p71
    %p73 = scmp.ne.s32.totalorder %s65, %s68
    %p74 = scmp.eq.s32.totalorder %s8, 0
    %p75 = por %p73, %p74
    %p76 = scmp.ne.s32.totalorder %s65, %s68
    %p77 = scmp.eq.s32.totalorder %s13, 1
    %p78 = por %p76, %p77
    %p79 = scmp.ne.s32.totalorder %s68, %s69
    %p80 = scmp.eq.s32.totalorder %s13, 0
    %p81 = por %p79, %p80
    %p82 = scmp.ne.s32.totalorder %s68, %s69
    %p83 = scmp.eq.s32.totalorder %s14, 1
    %p84 = por %p82, %p83
    %p86 = scmp.ne.s32.totalorder %s69, %s85
    %p87 = scmp.eq.s32.totalorder %s14, 0
    %p88 = por %p86, %p87
    %p89 = scmp.le.s32.totalorder 1, %s8
    %p90 = scmp.lt.s32.totalorder %s8, 3
    %p91 = pnand %p89, %p90
    %p92 = pneg %p91
    // Predicated region
    $region9: #{gcn_forward.6} parent=5 // pred_check
      _
    $region10: #{gcn_forward.6} parent=5 // pred_check_branch
      %94 = sbr.rel (%p91) target = $region12
    $region11: #{gcn_forward.6} parent=5 // pred_region
      %s95 = ssub.s32 %s8, 1
      // Predicated region
      $region13: #{gcn_forward.6} parent=11 // pred_check
        %p96 = pneg %p55
      $region14: #{gcn_forward.6} parent=11 // pred_check_branch
        %98 = sbr.rel (%p96) target = $region16
      $region15: #{gcn_forward.6} parent=11 // pred_region
        _
      $region16: #{gcn_forward.6} parent=11 // pred_fallthru
        _
    $region12: #{gcn_forward.6} parent=5 // pred_fallthru
      _
    %p99 = scmp.lt.s32.totalorder %s8, 2
    // Predicated region
    $region17: #{gcn_forward.6} parent=5 // pred_check
      %p100 = pneg %p99
    $region18: #{gcn_forward.6} parent=5 // pred_check_branch
      %102 = sbr.rel (%p100) target = $region20
    $region19: #{gcn_forward.6} parent=5 // pred_region
      // Predicated region
      $region21: #{gcn_forward.6} parent=19 // pred_check
        %p103 = pneg %p28
      $region22: #{gcn_forward.6} parent=19 // pred_check_branch
        %105 = sbr.rel (%p103) target = $region24
      $region23: #{gcn_forward.6} parent=19 // pred_region
        %s106 = smul.u32 16, %s8
        %p107 = scmp.lt.s32.totalorder %s106, 31
        %s108 = scalar_select %p107, %s106, 31
        %s109 = smul.addr %s108, 4
        %s110 = scalar_lea.vmem %s0, %s109
        %s111 = smul.u32 16, %s8
      $region24: #{gcn_forward.6} parent=19 // pred_fallthru
        _
    $region20: #{gcn_forward.6} parent=5 // pred_fallthru
      _
    %p112 = scmp.le.s32.totalorder 1, %s8
    %p113 = scmp.lt.s32.totalorder %s8, 3
    %p114 = pnand %p112, %p113
    %p115 = pneg %p114
    // Predicated region
    $region25: #{gcn_forward.6} parent=5 // pred_check
      _
    $region26: #{gcn_forward.6} parent=5 // pred_check_branch
      %117 = sbr.rel (%p114) target = $region28
    $region27: #{gcn_forward.6} parent=5 // pred_region
      %s118 = ssub.s32 %s8, 1
      %s119 = smul.u32 16, %s13
      %p120 = scmp.lt.s32.totalorder %s119, 31
      %s121 = scalar_select %p120, %s119, 31
      %s122 = smul.addr %s121, 4
      %s123 = scalar_lea.vmem %s0, %s122
      %p124 = pneg %p34
      %p125 = pneg %p31
      %p126 = pneg %p55
      %p127 = pneg %p52
      %p128 = pneg %p81
      %p129 = pneg %p78
      %s130 = smul.u32 16, %s13
      %p131 = scmp.lt.s32.totalorder %s130, 31
      %s132 = scalar_select %p131, %s130, 31
      %s133 = smul.addr %s132, 4
      %s134 = scalar_lea.vmem %s2, %s133
      %s135 = smul.u32 16, %s13
      %p136 = scmp.lt.s32.totalorder %s135, 31
      %s137 = scalar_select %p136, %s135, 31
      %s138 = smul.addr %s137, 4
      %s139 = scalar_lea.vmem %s0, %s138
      %s140 = smul.u32 16, %s13
      %s141 = smul.u32 16, %s13
      %p142 = scmp.lt.s32.totalorder %s141, 31
      %s143 = scalar_select %p142, %s141, 31
      %s144 = smul.addr %s143, 4
      %s145 = scalar_lea.vmem %s2, %s144
      %s146 = smul.u32 16, %s13
      %v148 = vld [vmem:[%s139] sm:$0xf]
      %v149 = vld [vmem:[%s139 + $0x4] sm:$0xf]
      %v150 = vld [vmem:[%s139 + $0x8] sm:$0xf]
      %v151 = vld [vmem:[%s139 + $0xc] sm:$0xf]
      %v152 = vld [vmem:[%s139 + $0x10] sm:$0xf]
      %v153 = vld [vmem:[%s139 + $0x14] sm:$0xf]
      %v154 = vld [vmem:[%s139 + $0x18] sm:$0xf]
      %v155 = vld [vmem:[%s139 + $0x1c] sm:$0xf]
      %v156 = vld [vmem:[%s139 + $0x20] sm:$0xf]
      %v157 = vld [vmem:[%s139 + $0x24] sm:$0xf]
      %v158 = vld [vmem:[%s139 + $0x28] sm:$0xf]
      %v159 = vld [vmem:[%s139 + $0x2c] sm:$0xf]
      %v160 = vld [vmem:[%s139 + $0x30] sm:$0xf]
      %v161 = vld [vmem:[%s139 + $0x34] sm:$0xf]
      %v162 = vld [vmem:[%s139 + $0x38] sm:$0xf]
      %v163 = vld [vmem:[%s139 + $0x3c] sm:$0xf]
      %v164 = vld [vmem:[%s1] sm:$0xf]
      %v165 = vld [vmem:[%s1 + $0x4] sm:$0xf]
      %v166 = vld [vmem:[%s1 + $0x8] sm:$0xf]
      %v167 = vld [vmem:[%s1 + $0xc] sm:$0xf]
      %v168 = vld [vmem:[%s1 + $0x10] sm:$0xf]
      %v169 = vld [vmem:[%s1 + $0x14] sm:$0xf]
      %v170 = vld [vmem:[%s1 + $0x18] sm:$0xf]
      %v171 = vld [vmem:[%s1 + $0x1c] sm:$0xf]
      %v172 = vld [vmem:[%s1 + $0x20] sm:$0xf]
      %v173 = vld [vmem:[%s1 + $0x24] sm:$0xf]
      %v174 = vld [vmem:[%s1 + $0x28] sm:$0xf]
      %v175 = vld [vmem:[%s1 + $0x2c] sm:$0xf]
      %v176 = vld [vmem:[%s1 + $0x30] sm:$0xf]
      %v177 = vld [vmem:[%s1 + $0x34] sm:$0xf]
      %v178 = vld [vmem:[%s1 + $0x38] sm:$0xf]
      %v179 = vld [vmem:[%s1 + $0x3c] sm:$0xf]
      %v196 = vunpack.c.l.b16 %v148
      %v197 = vunpack.c.l.b16 %v149
      %v198 = vunpack.c.l.b16 %v150
      %v199 = vunpack.c.l.b16 %v151
      %v200 = vunpack.c.l.b16 %v152
      %v201 = vunpack.c.l.b16 %v153
      %v202 = vunpack.c.l.b16 %v154
      %v203 = vunpack.c.l.b16 %v155
      %v204 = vunpack.c.l.b16 %v156
      %v205 = vunpack.c.l.b16 %v157
      %v206 = vunpack.c.l.b16 %v158
      %v207 = vunpack.c.l.b16 %v159
      %v208 = vunpack.c.l.b16 %v160
      %v209 = vunpack.c.l.b16 %v161
      %v210 = vunpack.c.l.b16 %v162
      %v211 = vunpack.c.l.b16 %v163
      %v212 = vpack.c.b16 %v197, %v196
      %v213 = vpack.c.b16 %v199, %v198
      %v214 = vpack.c.b16 %v201, %v200
      %v215 = vpack.c.b16 %v203, %v202
      %v216 = vpack.c.b16 %v205, %v204
      %v217 = vpack.c.b16 %v207, %v206
      %v218 = vpack.c.b16 %v209, %v208
      %v219 = vpack.c.b16 %v211, %v210
      %v244 = vunpack.c.l.b16 %v164
      %v245 = vunpack.c.l.b16 %v165
      %v246 = vunpack.c.l.b16 %v166
      %v247 = vunpack.c.l.b16 %v167
      %v248 = vunpack.c.l.b16 %v168
      %v249 = vunpack.c.l.b16 %v169
      %v250 = vunpack.c.l.b16 %v170
      %v251 = vunpack.c.l.b16 %v171
      %v252 = vunpack.c.l.b16 %v172
      %v253 = vunpack.c.l.b16 %v173
      %v254 = vunpack.c.l.b16 %v174
      %v255 = vunpack.c.l.b16 %v175
      %v256 = vunpack.c.l.b16 %v176
      %v257 = vunpack.c.l.b16 %v177
      %v258 = vunpack.c.l.b16 %v178
      %v259 = vunpack.c.l.b16 %v179
      %v260 = vpack.c.b16 %v245, %v244
      %v261 = vpack.c.b16 %v247, %v246
      %v262 = vpack.c.b16 %v249, %v248
      %v263 = vpack.c.b16 %v251, %v250
      %v264 = vpack.c.b16 %v253, %v252
      %v265 = vpack.c.b16 %v255, %v254
      %v266 = vpack.c.b16 %v257, %v256
      %v267 = vpack.c.b16 %v259, %v258
      %276 = vmatprep.subr.bf16.mxu0 0
      %277 = vmatpush1.bf16.msra.mxu0 %v267
      %278 = vmatprep.subr.bf16.mxu0 0
      %279 = vmatpush1.bf16.msra.mxu0 %v266
      %280 = vmatprep.subr.bf16.mxu0 0
      %281 = vmatpush1.bf16.msra.mxu0 %v265
      %282 = vmatprep.subr.bf16.mxu0 0
      %283 = vmatpush1.bf16.msra.mxu0 %v264
      %284 = vmatprep.subr.bf16.mxu0 0
      %285 = vmatpush1.bf16.msra.mxu0 %v263
      %286 = vmatprep.subr.bf16.mxu0 0
      %287 = vmatpush1.bf16.msra.mxu0 %v262
      %288 = vmatprep.subr.bf16.mxu0 0
      %289 = vmatpush1.bf16.msra.mxu0 %v261
      %290 = vmatprep.subr.bf16.mxu0 0
      %291 = vmatpush1.bf16.msra.mxu0 %v260
      %292 = vmatprep.subr.bf16.mxu0 0
      %293 = vmatpush2.bf16.msra.mxu0 0
      %294 = vmatprep.subr.bf16.mxu0 0
      %295 = vmatpush2.bf16.msra.mxu0 0
      %296 = vmatprep.subr.bf16.mxu0 0
      %297 = vmatpush2.bf16.msra.mxu0 0
      %298 = vmatprep.subr.bf16.mxu0 0
      %299 = vmatpush2.bf16.msra.mxu0 0
      %300 = vmatprep.subr.bf16.mxu0 0
      %301 = vmatpush2.bf16.msra.mxu0 0
      %302 = vmatprep.subr.bf16.mxu0 0
      %303 = vmatpush2.bf16.msra.mxu0 0
      %304 = vmatprep.subr.bf16.mxu0 0
      %305 = vmatpush2.bf16.msra.mxu0 0
      %306 = vmatprep.subr.bf16.mxu0 0
      %307 = vmatpush2.bf16.msra.mxu0 0
      %308 = vmatprep.mubr.bf16.mxu0 0
      %309 = vmatmul.mubr.bf16.gmra.mxu0 %v212
      %v310 = vpop.f32.mrf.mxu0
      %v311 = vadd.f32 0.0, %v310
      %v312 = vpop.f32.mrf.mxu0
      %v313 = vpop.f32.mrf.mxu0
      %v314 = vadd.f32 0.0, %v313
      %v315 = vpop.f32.mrf.mxu0
      %316 = vmatprep.mubr.bf16.mxu0 0
      %317 = vmatmul.mubr.bf16.gmra.mxu0 %v213
      %v318 = vpop.f32.mrf.mxu0
      %v319 = vadd.f32 0.0, %v318
      %v320 = vpop.f32.mrf.mxu0
      %v321 = vpop.f32.mrf.mxu0
      %v322 = vadd.f32 0.0, %v321
      %v323 = vpop.f32.mrf.mxu0
      %324 = vmatprep.mubr.bf16.mxu0 0
      %325 = vmatmul.mubr.bf16.gmra.mxu0 %v214
      %v326 = vpop.f32.mrf.mxu0
      %v327 = vadd.f32 0.0, %v326
      %v328 = vpop.f32.mrf.mxu0
      %v329 = vpop.f32.mrf.mxu0
      %v330 = vadd.f32 0.0, %v329
      %v331 = vpop.f32.mrf.mxu0
      %332 = vmatprep.mubr.bf16.mxu0 0
      %333 = vmatmul.mubr.bf16.gmra.mxu0 %v215
      %v334 = vpop.f32.mrf.mxu0
      %v335 = vadd.f32 0.0, %v334
      %v336 = vpop.f32.mrf.mxu0
      %v337 = vpop.f32.mrf.mxu0
      %v338 = vadd.f32 0.0, %v337
      %v339 = vpop.f32.mrf.mxu0
      %340 = vmatprep.mubr.bf16.mxu0 0
      %341 = vmatmul.mubr.bf16.gmra.mxu0 %v216
      %v342 = vpop.f32.mrf.mxu0
      %v343 = vadd.f32 0.0, %v342
      %v344 = vpop.f32.mrf.mxu0
      %v345 = vpop.f32.mrf.mxu0
      %v346 = vadd.f32 0.0, %v345
      %v347 = vpop.f32.mrf.mxu0
      %348 = vmatprep.mubr.bf16.mxu0 0
      %349 = vmatmul.mubr.bf16.gmra.mxu0 %v217
      %v350 = vpop.f32.mrf.mxu0
      %v351 = vadd.f32 0.0, %v350
      %v352 = vpop.f32.mrf.mxu0
      %v353 = vpop.f32.mrf.mxu0
      %v354 = vadd.f32 0.0, %v353
      %v355 = vpop.f32.mrf.mxu0
      %356 = vmatprep.mubr.bf16.mxu0 0
      %357 = vmatmul.mubr.bf16.gmra.mxu0 %v218
      %v358 = vpop.f32.mrf.mxu0
      %v359 = vadd.f32 0.0, %v358
      %v360 = vpop.f32.mrf.mxu0
      %v361 = vpop.f32.mrf.mxu0
      %v362 = vadd.f32 0.0, %v361
      %v363 = vpop.f32.mrf.mxu0
      %364 = vmatprep.mubr.bf16.mxu0 0
      %365 = vmatmul.mubr.bf16.gmra.mxu0 %v219
      %v366 = vpop.f32.mrf.mxu0
      %v367 = vadd.f32 0.0, %v366
      %v368 = vpop.f32.mrf.mxu0
      %v369 = vpop.f32.mrf.mxu0
      %v370 = vadd.f32 0.0, %v369
      %v371 = vpop.f32.mrf.mxu0
      %372 = vdwg.mxu0
      %v373 = vpack.c.bf16 %v314, %v311
      %v374 = vpack.c.bf16 %v322, %v319
      %v375 = vpack.c.bf16 %v330, %v327
      %v376 = vpack.c.bf16 %v338, %v335
      %v377 = vpack.c.bf16 %v346, %v343
      %v378 = vpack.c.bf16 %v354, %v351
      %v379 = vpack.c.bf16 %v362, %v359
      %v380 = vpack.c.bf16 %v370, %v367
      %v389 = vunpack.c.l.b16 %v373
      %v390 = vunpack.c.h.b16 %v373
      %v391 = vunpack.c.l.b16 %v374
      %v392 = vunpack.c.h.b16 %v374
      %v393 = vunpack.c.l.b16 %v375
      %v394 = vunpack.c.h.b16 %v375
      %v395 = vunpack.c.l.b16 %v376
      %v396 = vunpack.c.h.b16 %v376
      %v397 = vunpack.c.l.b16 %v377
      %v398 = vunpack.c.h.b16 %v377
      %v399 = vunpack.c.l.b16 %v378
      %v400 = vunpack.c.h.b16 %v378
      %v401 = vunpack.c.l.b16 %v379
      %v402 = vunpack.c.h.b16 %v379
      %v403 = vunpack.c.l.b16 %v380
      %v404 = vunpack.c.h.b16 %v380
      %v405 = vpack.c.b16 %v389, %v389
      %v406 = vpack.c.b16 %v390, %v390
      %v407 = vpack.c.b16 %v391, %v391
      %v408 = vpack.c.b16 %v392, %v392
      %v409 = vpack.c.b16 %v393, %v393
      %v410 = vpack.c.b16 %v394, %v394
      %v411 = vpack.c.b16 %v395, %v395
      %v412 = vpack.c.b16 %v396, %v396
      %v413 = vpack.c.b16 %v397, %v397
      %v414 = vpack.c.b16 %v398, %v398
      %v415 = vpack.c.b16 %v399, %v399
      %v416 = vpack.c.b16 %v400, %v400
      %v417 = vpack.c.b16 %v401, %v401
      %v418 = vpack.c.b16 %v402, %v402
      %v419 = vpack.c.b16 %v403, %v403
      %v420 = vpack.c.b16 %v404, %v404
      %437 = vst [vmem:[%s145] sm:$0xf] %v405
      %438 = vst [vmem:[%s145 + $0x4] sm:$0xf] %v406
      %439 = vst [vmem:[%s145 + $0x8] sm:$0xf] %v407
      %440 = vst [vmem:[%s145 + $0xc] sm:$0xf] %v408
      %441 = vst [vmem:[%s145 + $0x10] sm:$0xf] %v409
      %442 = vst [vmem:[%s145 + $0x14] sm:$0xf] %v410
      %443 = vst [vmem:[%s145 + $0x18] sm:$0xf] %v411
      %444 = vst [vmem:[%s145 + $0x1c] sm:$0xf] %v412
      %445 = vst [vmem:[%s145 + $0x20] sm:$0xf] %v413
      %446 = vst [vmem:[%s145 + $0x24] sm:$0xf] %v414
      %447 = vst [vmem:[%s145 + $0x28] sm:$0xf] %v415
      %448 = vst [vmem:[%s145 + $0x2c] sm:$0xf] %v416
      %449 = vst [vmem:[%s145 + $0x30] sm:$0xf] %v417
      %450 = vst [vmem:[%s145 + $0x34] sm:$0xf] %v418
      %451 = vst [vmem:[%s145 + $0x38] sm:$0xf] %v419
      %452 = vst [vmem:[%s145 + $0x3c] sm:$0xf] %v420
      %s453 = smul.u32 16, %s13
      %p454 = scmp.lt.s32.totalorder %s453, 31
      %s455 = scalar_select %p454, %s453, 31
      %s456 = smul.addr %s455, 4
      %s457 = scalar_lea.vmem %s2, %s456
      // Predicated region
      $region29: #{gcn_forward.6} parent=27 // pred_check
        %p458 = pneg %p78
      $region30: #{gcn_forward.6} parent=27 // pred_check_branch
        %460 = sbr.rel (%p458) target = $region32
      $region31: #{gcn_forward.6} parent=27 // pred_region
        %s461 = smul.u32 16, %s13
      $region32: #{gcn_forward.6} parent=27 // pred_fallthru
        _
    $region28: #{gcn_forward.6} parent=5 // pred_fallthru
      _
    %p462 = scmp.le.s32.totalorder 2, %s8
    // Predicated region
    $region33: #{gcn_forward.6} parent=5 // pred_check
      %p463 = pneg %p462
    $region34: #{gcn_forward.6} parent=5 // pred_check_branch
      %465 = sbr.rel (%p463) target = $region36
    $region35: #{gcn_forward.6} parent=5 // pred_region
      %s466 = ssub.s32 %s8, 2
      // Predicated region
      $region37: #{gcn_forward.6} parent=35 // pred_check
        %p467 = pneg %p84
      $region38: #{gcn_forward.6} parent=35 // pred_check_branch
        %469 = sbr.rel (%p467) target = $region40
      $region39: #{gcn_forward.6} parent=35 // pred_region
        %s470 = smul.u32 16, %s14
        %p471 = scmp.lt.s32.totalorder %s470, 31
        %s472 = scalar_select %p471, %s470, 31
        %s473 = smul.addr %s472, 4
        %s474 = scalar_lea.vmem %s2, %s473
      $region40: #{gcn_forward.6} parent=35 // pred_fallthru
        _
    $region36: #{gcn_forward.6} parent=5 // pred_fallthru
      _
  $region6: #{gcn_forward.6} parent=0 // loop_footer
    %s12 = sadd.s32 1, %s8
  $region7: #{gcn_forward.6} parent=0 // loop_footer_branch
    %7 = sbr.rel target = $region3
  $region8: #{gcn_forward.6} parent=0 // loop_exit
    _

// kernel: gcn_forward.4
$region0: #{gcn_forward.4}
  #allocation0 [shape = 'u32[]', space=smem, size = 0x4, offset = 0x4, fixed_abs, tag = 'smem constant byte address 0x4 - core index']
  #allocation1 [shape = 'u32[144,128]{1,0:T(1,128)}', space=vmem, size = 0x12000, scoped, tag = 'internal scratch']
  %s0 = inlined_call_operand.vmem [shape: bf16[256,256], index: 0, kind: input, shape index: {}]
  %s1 = inlined_call_operand.vmem [shape: bf16[256,128], index: 1, kind: input, shape index: {}]
  %s2 = inlined_call_operand.vmem [shape: bf16[128,128], index: 2, kind: input, shape index: {}]
  %s3 = inlined_call_operand.vmem [shape: f32[1,128], index: 3, kind: input, shape index: {}]
  %s4 = inlined_call_operand.vmem [shape: bf16[256,128], index: 4, kind: output, shape index: {}]
  %s5 = sld [smem:[#allocation0]]
  $region49: #{gcn_forward.4} parent=0
    _
  %s7 = ssub.s32 1, %s5
  %s8 = scalar_select 0, %s7, %s5
  loop: start=0, step=1, limit=4
  $region2: #{gcn_forward.4} parent=0 // loop_pre_header
    _
  $region3: #{gcn_forward.4} parent=0 // loop_header
    %s10 = sphi 0, %s14
    %p11 = scmp.ge.s32.totalorder %s10, 4
    %s20 = sphi 0, %s22
    %s23 = sphi 0, %s20
    %s24 = sphi 0, %s23
    %s40 = sphi 0, %s24
    %s44 = sphi 0, %s44
    %s46 = sphi 0, %s44
    %s47 = sphi 0, %s46
    %s61 = sphi 0, %s47
    %s65 = sphi 0, %s65
    %s67 = sphi 0, %s65
    %s68 = sphi 0, %s67
    %s82 = sphi 0, %s68
    %s86 = sphi 0, %s86
    %s88 = sphi 0, %s86
    %s89 = sphi 0, %s88
    %s103 = sphi 0, %s89
    %s109 = sphi 0, %s111
    %s112 = sphi 0, %s109
    %s113 = sphi 0, %s112
    %s129 = sphi 0, %s113
  $region4: #{gcn_forward.4} parent=0 // loop_header_branch
    %13 = sbr.rel (%p11) target = $region8
  $region5: #{gcn_forward.4} parent=0 // loop_body
    %s15 = ssub.s32 %s10, 1
    %s16 = ssub.s32 %s10, 2
    %s17 = sadd.s32 %s10, 1
    %s18 = ssub.s32 %s10, %s17
    %p19 = scmp.eq.s32.totalorder %s18, 0
    %s21 = sadd.s32 %s20, 1
    %s22 = scalar_select %p19, %s20, %s21
    %p25 = pneg %p19
    %p26 = scmp.eq.s32.totalorder %s10, 1
    %p27 = por %p25, %p26
    %p28 = scmp.ne.s32.totalorder %s20, %s23
    %p29 = scmp.eq.s32.totalorder %s10, 0
    %p30 = por %p28, %p29
    %p31 = scmp.ne.s32.totalorder %s20, %s23
    %p32 = scmp.eq.s32.totalorder %s15, 1
    %p33 = por %p31, %p32
    %p34 = scmp.ne.s32.totalorder %s23, %s24
    %p35 = scmp.eq.s32.totalorder %s15, 0
    %p36 = por %p34, %p35
    %p37 = scmp.ne.s32.totalorder %s23, %s24
    %p38 = scmp.eq.s32.totalorder %s16, 1
    %p39 = por %p37, %p38
    %p41 = scmp.ne.s32.totalorder %s24, %s40
    %p42 = scmp.eq.s32.totalorder %s16, 0
    %p43 = por %p41, %p42
    %s45 = sadd.s32 %s44, 1
    %p48 = scmp.eq.s32.totalorder %s10, 1
    %p49 = scmp.ne.s32.totalorder %s44, %s46
    %p50 = scmp.eq.s32.totalorder %s10, 0
    %p51 = por %p49, %p50
    %p52 = scmp.ne.s32.totalorder %s44, %s46
    %p53 = scmp.eq.s32.totalorder %s15, 1
    %p54 = por %p52, %p53
    %p55 = scmp.ne.s32.totalorder %s46, %s47
    %p56 = scmp.eq.s32.totalorder %s15, 0
    %p57 = por %p55, %p56
    %p58 = scmp.ne.s32.totalorder %s46, %s47
    %p59 = scmp.eq.s32.totalorder %s16, 1
    %p60 = por %p58, %p59
    %p62 = scmp.ne.s32.totalorder %s47, %s61
    %p63 = scmp.eq.s32.totalorder %s16, 0
    %p64 = por %p62, %p63
    %s66 = sadd.s32 %s65, 1
    %p69 = scmp.eq.s32.totalorder %s10, 1
    %p70 = scmp.ne.s32.totalorder %s65, %s67
    %p71 = scmp.eq.s32.totalorder %s10, 0
    %p72 = por %p70, %p71
    %p73 = scmp.ne.s32.totalorder %s65, %s67
    %p74 = scmp.eq.s32.totalorder %s15, 1
    %p75 = por %p73, %p74
    %p76 = scmp.ne.s32.totalorder %s67, %s68
    %p77 = scmp.eq.s32.totalorder %s15, 0
    %p78 = por %p76, %p77
    %p79 = scmp.ne.s32.totalorder %s67, %s68
    %p80 = scmp.eq.s32.totalorder %s16, 1
    %p81 = por %p79, %p80
    %p83 = scmp.ne.s32.totalorder %s68, %s82
    %p84 = scmp.eq.s32.totalorder %s16, 0
    %p85 = por %p83, %p84
    %s87 = sadd.s32 %s86, 1
    %p90 = scmp.eq.s32.totalorder %s10, 1
    %p91 = scmp.ne.s32.totalorder %s86, %s88
    %p92 = scmp.eq.s32.totalorder %s10, 0
    %p93 = por %p91, %p92
    %p94 = scmp.ne.s32.totalorder %s86, %s88
    %p95 = scmp.eq.s32.totalorder %s15, 1
    %p96 = por %p94, %p95
    %p97 = scmp.ne.s32.totalorder %s88, %s89
    %p98 = scmp.eq.s32.totalorder %s15, 0
    %p99 = por %p97, %p98
    %p100 = scmp.ne.s32.totalorder %s88, %s89
    %p101 = scmp.eq.s32.totalorder %s16, 1
    %p102 = por %p100, %p101
    %p104 = scmp.ne.s32.totalorder %s89, %s103
    %p105 = scmp.eq.s32.totalorder %s16, 0
    %p106 = por %p104, %p105
    %s107 = ssub.s32 %s10, %s17
    %p108 = scmp.eq.s32.totalorder %s107, 0
    %s110 = sadd.s32 %s109, 1
    %s111 = scalar_select %p108, %s109, %s110
    %p114 = pneg %p108
    %p115 = scmp.eq.s32.totalorder %s10, 1
    %p116 = por %p114, %p115
    %p117 = scmp.ne.s32.totalorder %s109, %s112
    %p118 = scmp.eq.s32.totalorder %s10, 0
    %p119 = por %p117, %p118
    %p120 = scmp.ne.s32.totalorder %s109, %s112
    %p121 = scmp.eq.s32.totalorder %s15, 1
    %p122 = por %p120, %p121
    %p123 = scmp.ne.s32.totalorder %s112, %s113
    %p124 = scmp.eq.s32.totalorder %s15, 0
    %p125 = por %p123, %p124
    %p126 = scmp.ne.s32.totalorder %s112, %s113
    %p127 = scmp.eq.s32.totalorder %s16, 1
    %p128 = por %p126, %p127
    %p130 = scmp.ne.s32.totalorder %s113, %s129
    %p131 = scmp.eq.s32.totalorder %s16, 0
    %p132 = por %p130, %p131
    %p133 = scmp.le.s32.totalorder 1, %s10
    %p134 = scmp.lt.s32.totalorder %s10, 3
    %p135 = pnand %p133, %p134
    %p136 = pneg %p135
    // Predicated region
    $region9: #{gcn_forward.4} parent=5 // pred_check
      _
    $region10: #{gcn_forward.4} parent=5 // pred_check_branch
      %138 = sbr.rel (%p135) target = $region12
    $region11: #{gcn_forward.4} parent=5 // pred_region
      %s139 = ssub.s32 %s10, 1
      // Predicated region
      $region13: #{gcn_forward.4} parent=11 // pred_check
        %p140 = pneg %p57
      $region14: #{gcn_forward.4} parent=11 // pred_check_branch
        %142 = sbr.rel (%p140) target = $region16
      $region15: #{gcn_forward.4} parent=11 // pred_region
        _
      $region16: #{gcn_forward.4} parent=11 // pred_fallthru
        _
      // Predicated region
      $region17: #{gcn_forward.4} parent=11 // pred_check
        %p143 = pneg %p78
      $region18: #{gcn_forward.4} parent=11 // pred_check_branch
        %145 = sbr.rel (%p143) target = $region20
      $region19: #{gcn_forward.4} parent=11 // pred_region
        _
      $region20: #{gcn_forward.4} parent=11 // pred_fallthru
        _
      // Predicated region
      $region21: #{gcn_forward.4} parent=11 // pred_check
        %p146 = pneg %p99
      $region22: #{gcn_forward.4} parent=11 // pred_check_branch
        %148 = sbr.rel (%p146) target = $region24
      $region23: #{gcn_forward.4} parent=11 // pred_region
        _
      $region24: #{gcn_forward.4} parent=11 // pred_fallthru
        _
    $region12: #{gcn_forward.4} parent=5 // pred_fallthru
      _
    %p149 = scmp.lt.s32.totalorder %s10, 2
    // Predicated region
    $region25: #{gcn_forward.4} parent=5 // pred_check
      %p150 = pneg %p149
    $region26: #{gcn_forward.4} parent=5 // pred_check_branch
      %152 = sbr.rel (%p150) target = $region28
    $region27: #{gcn_forward.4} parent=5 // pred_region
      // Predicated region
      $region29: #{gcn_forward.4} parent=27 // pred_check
        %p153 = pneg %p30
      $region30: #{gcn_forward.4} parent=27 // pred_check_branch
        %155 = sbr.rel (%p153) target = $region32
      $region31: #{gcn_forward.4} parent=27 // pred_region
        %s156 = smul.u32 16, %s10
        %p157 = scmp.lt.s32.totalorder %s156, 31
        %s158 = scalar_select %p157, %s156, 31
        %s159 = smul.addr %s158, 2
        %s160 = smul.addr %s159, 4
        %s161 = scalar_lea.vmem %s0, %s160
        %s162 = smul.u32 16, %s10
      $region32: #{gcn_forward.4} parent=27 // pred_fallthru
        _
    $region28: #{gcn_forward.4} parent=5 // pred_fallthru
      _
    %p163 = scmp.le.s32.totalorder 1, %s10
    %p164 = scmp.lt.s32.totalorder %s10, 3
    %p165 = pnand %p163, %p164
    %p166 = pneg %p165
    // Predicated region
    $region33: #{gcn_forward.4} parent=5 // pred_check
      _
    $region34: #{gcn_forward.4} parent=5 // pred_check_branch
      %168 = sbr.rel (%p165) target = $region36
    $region35: #{gcn_forward.4} parent=5 // pred_region
      %s169 = ssub.s32 %s10, 1
      %s170 = smul.u32 16, %s15
      %p171 = scmp.lt.s32.totalorder %s170, 31
      %s172 = scalar_select %p171, %s170, 31
      %s173 = smul.addr %s172, 2
      %s174 = smul.addr %s173, 4
      %s175 = scalar_lea.vmem %s0, %s174
      %p176 = pneg %p36
      %p177 = pneg %p33
      %p178 = pneg %p57
      %p179 = pneg %p54
      %p180 = pneg %p78
      %p181 = pneg %p75
      %p182 = pneg %p99
      %p183 = pneg %p96
      %p184 = pneg %p125
      %p185 = pneg %p122
      %s186 = smul.u32 16, %s15
      %p187 = scmp.lt.s32.totalorder %s186, 31
      %s188 = scalar_select %p187, %s186, 31
      %s189 = smul.addr %s188, 4
      %s190 = scalar_lea.vmem %s4, %s189
      %s191 = smul.u32 16, %s15
      %p192 = scmp.lt.s32.totalorder %s191, 31
      %s193 = scalar_select %p192, %s191, 31
      %s194 = smul.addr %s193, 2
      %s195 = smul.addr %s194, 4
      %s196 = scalar_lea.vmem %s0, %s195
      %s197 = smul.u32 16, %s15
      %s198 = smul.u32 16, %s15
      %p199 = scmp.lt.s32.totalorder %s198, 31
      %s200 = scalar_select %p199, %s198, 31
      %s201 = smul.addr %s200, 4
      %s202 = scalar_lea.vmem %s4, %s201
      %s203 = smul.u32 16, %s15
      %v205 = vld [vmem:[%s196] sm:$0xff]
      %v206 = vld [vmem:[%s196 + $0x8] sm:$0xff]
      %v207 = vld [vmem:[%s196 + $0x10] sm:$0xff]
      %v208 = vld [vmem:[%s196 + $0x18] sm:$0xff]
      %v209 = vld [vmem:[%s196 + $0x20] sm:$0xff]
      %v210 = vld [vmem:[%s196 + $0x28] sm:$0xff]
      %v211 = vld [vmem:[%s196 + $0x30] sm:$0xff]
      %v212 = vld [vmem:[%s196 + $0x38] sm:$0xff]
      %v213 = vld [vmem:[%s196 + $0x40] sm:$0xff]
      %v214 = vld [vmem:[%s196 + $0x48] sm:$0xff]
      %v215 = vld [vmem:[%s196 + $0x50] sm:$0xff]
      %v216 = vld [vmem:[%s196 + $0x58] sm:$0xff]
      %v217 = vld [vmem:[%s196 + $0x60] sm:$0xff]
      %v218 = vld [vmem:[%s196 + $0x68] sm:$0xff]
      %v219 = vld [vmem:[%s196 + $0x70] sm:$0xff]
      %v220 = vld [vmem:[%s196 + $0x78] sm:$0xff]
      %v221 = vld [vmem:[%s1] sm:$0xf]
      %v222 = vld [vmem:[%s1 + $0x4] sm:$0xf]
      %v223 = vld [vmem:[%s1 + $0x8] sm:$0xf]
      %v224 = vld [vmem:[%s1 + $0xc] sm:$0xf]
      %v225 = vld [vmem:[%s1 + $0x10] sm:$0xf]
      %v226 = vld [vmem:[%s1 + $0x14] sm:$0xf]
      %v227 = vld [vmem:[%s1 + $0x18] sm:$0xf]
      %v228 = vld [vmem:[%s1 + $0x1c] sm:$0xf]
      %v229 = vld [vmem:[%s1 + $0x20] sm:$0xf]
      %v230 = vld [vmem:[%s1 + $0x24] sm:$0xf]
      %v231 = vld [vmem:[%s1 + $0x28] sm:$0xf]
      %v232 = vld [vmem:[%s1 + $0x2c] sm:$0xf]
      %v233 = vld [vmem:[%s1 + $0x30] sm:$0xf]
      %v234 = vld [vmem:[%s1 + $0x34] sm:$0xf]
      %v235 = vld [vmem:[%s1 + $0x38] sm:$0xf]
      %v236 = vld [vmem:[%s1 + $0x3c] sm:$0xf]
      %v237 = vld [vmem:[%s1 + $0x40] sm:$0xf]
      %v238 = vld [vmem:[%s1 + $0x44] sm:$0xf]
      %v239 = vld [vmem:[%s1 + $0x48] sm:$0xf]
      %v240 = vld [vmem:[%s1 + $0x4c] sm:$0xf]
      %v241 = vld [vmem:[%s1 + $0x50] sm:$0xf]
      %v242 = vld [vmem:[%s1 + $0x54] sm:$0xf]
      %v243 = vld [vmem:[%s1 + $0x58] sm:$0xf]
      %v244 = vld [vmem:[%s1 + $0x5c] sm:$0xf]
      %v245 = vld [vmem:[%s1 + $0x60] sm:$0xf]
      %v246 = vld [vmem:[%s1 + $0x64] sm:$0xf]
      %v247 = vld [vmem:[%s1 + $0x68] sm:$0xf]
      %v248 = vld [vmem:[%s1 + $0x6c] sm:$0xf]
      %v249 = vld [vmem:[%s1 + $0x70] sm:$0xf]
      %v250 = vld [vmem:[%s1 + $0x74] sm:$0xf]
      %v251 = vld [vmem:[%s1 + $0x78] sm:$0xf]
      %v252 = vld [vmem:[%s1 + $0x7c] sm:$0xf]
      %v269 = vunpack.c.l.b16 %v205
      %v270 = vunpack.c.h.b16 %v205
      %v271 = vunpack.c.l.b16 %v206
      %v272 = vunpack.c.h.b16 %v206
      %v273 = vunpack.c.l.b16 %v207
      %v274 = vunpack.c.h.b16 %v207
      %v275 = vunpack.c.l.b16 %v208
      %v276 = vunpack.c.h.b16 %v208
      %v277 = vunpack.c.l.b16 %v209
      %v278 = vunpack.c.h.b16 %v209
      %v279 = vunpack.c.l.b16 %v210
      %v280 = vunpack.c.h.b16 %v210
      %v281 = vunpack.c.l.b16 %v211
      %v282 = vunpack.c.h.b16 %v211
      %v283 = vunpack.c.l.b16 %v212
      %v284 = vunpack.c.h.b16 %v212
      %v285 = vunpack.c.l.b16 %v213
      %v286 = vunpack.c.h.b16 %v213
      %v287 = vunpack.c.l.b16 %v214
      %v288 = vunpack.c.h.b16 %v214
      %v289 = vunpack.c.l.b16 %v215
      %v290 = vunpack.c.h.b16 %v215
      %v291 = vunpack.c.l.b16 %v216
      %v292 = vunpack.c.h.b16 %v216
      %v293 = vunpack.c.l.b16 %v217
      %v294 = vunpack.c.h.b16 %v217
      %v295 = vunpack.c.l.b16 %v218
      %v296 = vunpack.c.h.b16 %v218
      %v297 = vunpack.c.l.b16 %v219
      %v298 = vunpack.c.h.b16 %v219
      %v299 = vunpack.c.l.b16 %v220
      %v300 = vunpack.c.h.b16 %v220
      %v301 = vpack.c.b16 %v271, %v269
      %v302 = vpack.c.b16 %v272, %v270
      %v303 = vpack.c.b16 %v275, %v273
      %v304 = vpack.c.b16 %v276, %v274
      %v305 = vpack.c.b16 %v279, %v277
      %v306 = vpack.c.b16 %v280, %v278
      %v307 = vpack.c.b16 %v283, %v281
      %v308 = vpack.c.b16 %v284, %v282
      %v309 = vpack.c.b16 %v287, %v285
      %v310 = vpack.c.b16 %v288, %v286
      %v311 = vpack.c.b16 %v291, %v289
      %v312 = vpack.c.b16 %v292, %v290
      %v313 = vpack.c.b16 %v295, %v293
      %v314 = vpack.c.b16 %v296, %v294
      %v315 = vpack.c.b16 %v299, %v297
      %v316 = vpack.c.b16 %v300, %v298
      %v365 = vunpack.c.l.b16 %v221
      %v366 = vunpack.c.l.b16 %v222
      %v367 = vunpack.c.l.b16 %v223
      %v368 = vunpack.c.l.b16 %v224
      %v369 = vunpack.c.l.b16 %v225
      %v370 = vunpack.c.l.b16 %v226
      %v371 = vunpack.c.l.b16 %v227
      %v372 = vunpack.c.l.b16 %v228
      %v373 = vunpack.c.l.b16 %v229
      %v374 = vunpack.c.l.b16 %v230
      %v375 = vunpack.c.l.b16 %v231
      %v376 = vunpack.c.l.b16 %v232
      %v377 = vunpack.c.l.b16 %v233
      %v378 = vunpack.c.l.b16 %v234
      %v379 = vunpack.c.l.b16 %v235
      %v380 = vunpack.c.l.b16 %v236
      %v381 = vunpack.c.l.b16 %v237
      %v382 = vunpack.c.l.b16 %v238
      %v383 = vunpack.c.l.b16 %v239
      %v384 = vunpack.c.l.b16 %v240
      %v385 = vunpack.c.l.b16 %v241
      %v386 = vunpack.c.l.b16 %v242
      %v387 = vunpack.c.l.b16 %v243
      %v388 = vunpack.c.l.b16 %v244
      %v389 = vunpack.c.l.b16 %v245
      %v390 = vunpack.c.l.b16 %v246
      %v391 = vunpack.c.l.b16 %v247
      %v392 = vunpack.c.l.b16 %v248
      %v393 = vunpack.c.l.b16 %v249
      %v394 = vunpack.c.l.b16 %v250
      %v395 = vunpack.c.l.b16 %v251
      %v396 = vunpack.c.l.b16 %v252
      %v397 = vpack.c.b16 %v366, %v365
      %v398 = vpack.c.b16 %v368, %v367
      %v399 = vpack.c.b16 %v370, %v369
      %v400 = vpack.c.b16 %v372, %v371
      %v401 = vpack.c.b16 %v374, %v373
      %v402 = vpack.c.b16 %v376, %v375
      %v403 = vpack.c.b16 %v378, %v377
      %v404 = vpack.c.b16 %v380, %v379
      %v405 = vpack.c.b16 %v382, %v381
      %v406 = vpack.c.b16 %v384, %v383
      %v407 = vpack.c.b16 %v386, %v385
      %v408 = vpack.c.b16 %v388, %v387
      %v409 = vpack.c.b16 %v390, %v389
      %v410 = vpack.c.b16 %v392, %v391
      %v411 = vpack.c.b16 %v394, %v393
      %v412 = vpack.c.b16 %v396, %v395
      %429 = vmatprep.subr.bf16.mxu0 0
      %430 = vmatpush1.bf16.msra.mxu0 %v404
      %431 = vmatprep.subr.bf16.mxu0 0
      %432 = vmatpush1.bf16.msra.mxu0 %v403
      %433 = vmatprep.subr.bf16.mxu0 0
      %434 = vmatpush1.bf16.msra.mxu0 %v402
      %435 = vmatprep.subr.bf16.mxu0 0
      %436 = vmatpush1.bf16.msra.mxu0 %v401
      %437 = vmatprep.subr.bf16.mxu0 0
      %438 = vmatpush1.bf16.msra.mxu0 %v400
      %439 = vmatprep.subr.bf16.mxu0 0
      %440 = vmatpush1.bf16.msra.mxu0 %v399
      %441 = vmatprep.subr.bf16.mxu0 0
      %442 = vmatpush1.bf16.msra.mxu0 %v398
      %443 = vmatprep.subr.bf16.mxu0 0
      %444 = vmatpush1.bf16.msra.mxu0 %v397
      %445 = vmatprep.subr.bf16.mxu0 0
      %446 = vmatpush2.bf16.msra.mxu0 %v412
      %447 = vmatprep.subr.bf16.mxu0 0
      %448 = vmatpush2.bf16.msra.mxu0 %v411
      %449 = vmatprep.subr.bf16.mxu0 0
      %450 = vmatpush2.bf16.msra.mxu0 %v410
      %451 = vmatprep.subr.bf16.mxu0 0
      %452 = vmatpush2.bf16.msra.mxu0 %v409
      %453 = vmatprep.subr.bf16.mxu0 0
      %454 = vmatpush2.bf16.msra.mxu0 %v408
      %455 = vmatprep.subr.bf16.mxu0 0
      %456 = vmatpush2.bf16.msra.mxu0 %v407
      %457 = vmatprep.subr.bf16.mxu0 0
      %458 = vmatpush2.bf16.msra.mxu0 %v406
      %459 = vmatprep.subr.bf16.mxu0 0
      %460 = vmatpush2.bf16.msra.mxu0 %v405
      %461 = vmatprep.mubr.bf16.mxu0 %v302
      %462 = vmatmul.mubr.bf16.gmra.mxu0 %v301
      %v463 = vpop.f32.mrf.mxu0
      %v464 = vadd.f32 0.0, %v463
      %v465 = vpop.f32.mrf.mxu0
      %v466 = vpop.f32.mrf.mxu0
      %v467 = vadd.f32 0.0, %v466
      %v468 = vpop.f32.mrf.mxu0
      %469 = vmatprep.mubr.bf16.mxu0 %v304
      %470 = vmatmul.mubr.bf16.gmra.mxu0 %v303
      %v471 = vpop.f32.mrf.mxu0
      %v472 = vadd.f32 0.0, %v471
      %v473 = vpop.f32.mrf.mxu0
      %v474 = vpop.f32.mrf.mxu0
      %v475 = vadd.f32 0.0, %v474
      %v476 = vpop.f32.mrf.mxu0
      %477 = vmatprep.mubr.bf16.mxu0 %v306
      %478 = vmatmul.mubr.bf16.gmra.mxu0 %v305
      %v479 = vpop.f32.mrf.mxu0
      %v480 = vadd.f32 0.0, %v479
      %v481 = vpop.f32.mrf.mxu0
      %v482 = vpop.f32.mrf.mxu0
      %v483 = vadd.f32 0.0, %v482
      %v484 = vpop.f32.mrf.mxu0
      %485 = vmatprep.mubr.bf16.mxu0 %v308
      %486 = vmatmul.mubr.bf16.gmra.mxu0 %v307
      %v487 = vpop.f32.mrf.mxu0
      %v488 = vadd.f32 0.0, %v487
      %v489 = vpop.f32.mrf.mxu0
      %v490 = vpop.f32.mrf.mxu0
      %v491 = vadd.f32 0.0, %v490
      %v492 = vpop.f32.mrf.mxu0
      %493 = vmatprep.mubr.bf16.mxu0 %v310
      %494 = vmatmul.mubr.bf16.gmra.mxu0 %v309
      %v495 = vpop.f32.mrf.mxu0
      %v496 = vadd.f32 0.0, %v495
      %v497 = vpop.f32.mrf.mxu0
      %v498 = vpop.f32.mrf.mxu0
      %v499 = vadd.f32 0.0, %v498
      %v500 = vpop.f32.mrf.mxu0
      %501 = vmatprep.mubr.bf16.mxu0 %v312
      %502 = vmatmul.mubr.bf16.gmra.mxu0 %v311
      %v503 = vpop.f32.mrf.mxu0
      %v504 = vadd.f32 0.0, %v503
      %v505 = vpop.f32.mrf.mxu0
      %v506 = vpop.f32.mrf.mxu0
      %v507 = vadd.f32 0.0, %v506
      %v508 = vpop.f32.mrf.mxu0
      %509 = vmatprep.mubr.bf16.mxu0 %v314
      %510 = vmatmul.mubr.bf16.gmra.mxu0 %v313
      %v511 = vpop.f32.mrf.mxu0
      %v512 = vadd.f32 0.0, %v511
      %v513 = vpop.f32.mrf.mxu0
      %v514 = vpop.f32.mrf.mxu0
      %v515 = vadd.f32 0.0, %v514
      %v516 = vpop.f32.mrf.mxu0
      %517 = vmatprep.mubr.bf16.mxu0 %v316
      %518 = vmatmul.mubr.bf16.gmra.mxu0 %v315
      %v519 = vpop.f32.mrf.mxu0
      %v520 = vadd.f32 0.0, %v519
      %v521 = vpop.f32.mrf.mxu0
      %v522 = vpop.f32.mrf.mxu0
      %v523 = vadd.f32 0.0, %v522
      %v524 = vpop.f32.mrf.mxu0
      %525 = vdwg.mxu0
      %v526 = vpack.c.bf16 %v467, %v464
      %v527 = vpack.c.bf16 %v475, %v472
      %v528 = vpack.c.bf16 %v483, %v480
      %v529 = vpack.c.bf16 %v491, %v488
      %v530 = vpack.c.bf16 %v499, %v496
      %v531 = vpack.c.bf16 %v507, %v504
      %v532 = vpack.c.bf16 %v515, %v512
      %v533 = vpack.c.bf16 %v523, %v520
      %v534 = vld [vmem:[%s2] sm:$0xf]
      %v535 = vld [vmem:[%s2 + $0x4] sm:$0xf]
      %v536 = vld [vmem:[%s2 + $0x8] sm:$0xf]
      %v537 = vld [vmem:[%s2 + $0xc] sm:$0xf]
      %v538 = vld [vmem:[%s2 + $0x10] sm:$0xf]
      %v539 = vld [vmem:[%s2 + $0x14] sm:$0xf]
      %v540 = vld [vmem:[%s2 + $0x18] sm:$0xf]
      %v541 = vld [vmem:[%s2 + $0x1c] sm:$0xf]
      %v542 = vld [vmem:[%s2 + $0x20] sm:$0xf]
      %v543 = vld [vmem:[%s2 + $0x24] sm:$0xf]
      %v544 = vld [vmem:[%s2 + $0x28] sm:$0xf]
      %v545 = vld [vmem:[%s2 + $0x2c] sm:$0xf]
      %v546 = vld [vmem:[%s2 + $0x30] sm:$0xf]
      %v547 = vld [vmem:[%s2 + $0x34] sm:$0xf]
      %v548 = vld [vmem:[%s2 + $0x38] sm:$0xf]
      %v549 = vld [vmem:[%s2 + $0x3c] sm:$0xf]
      %v550 = vld [vmem:[%s3] sm:$0x1]
      %v552 = vlaneseq
      %v553 = vshrl.u32 %v552, 7
      %v554 = vsub.s32 0, %v553
      %v555 = vrot.slane %v550, %v554
      %v573 = vunpack.c.l.b16 %v534
      %v574 = vunpack.c.l.b16 %v535
      %v575 = vunpack.c.l.b16 %v536
      %v576 = vunpack.c.l.b16 %v537
      %v577 = vunpack.c.l.b16 %v538
      %v578 = vunpack.c.l.b16 %v539
      %v579 = vunpack.c.l.b16 %v540
      %v580 = vunpack.c.l.b16 %v541
      %v581 = vunpack.c.l.b16 %v542
      %v582 = vunpack.c.l.b16 %v543
      %v583 = vunpack.c.l.b16 %v544
      %v584 = vunpack.c.l.b16 %v545
      %v585 = vunpack.c.l.b16 %v546
      %v586 = vunpack.c.l.b16 %v547
      %v587 = vunpack.c.l.b16 %v548
      %v588 = vunpack.c.l.b16 %v549
      %v589 = vpack.c.b16 %v574, %v573
      %v590 = vpack.c.b16 %v576, %v575
      %v591 = vpack.c.b16 %v578, %v577
      %v592 = vpack.c.b16 %v580, %v579
      %v593 = vpack.c.b16 %v582, %v581
      %v594 = vpack.c.b16 %v584, %v583
      %v595 = vpack.c.b16 %v586, %v585
      %v596 = vpack.c.b16 %v588, %v587
      %605 = vmatprep.subr.bf16.mxu0 0
      %606 = vmatpush1.bf16.msra.mxu0 %v596
      %607 = vmatprep.subr.bf16.mxu0 0
      %608 = vmatpush1.bf16.msra.mxu0 %v595
      %609 = vmatprep.subr.bf16.mxu0 0
      %610 = vmatpush1.bf16.msra.mxu0 %v594
      %611 = vmatprep.subr.bf16.mxu0 0
      %612 = vmatpush1.bf16.msra.mxu0 %v593
      %613 = vmatprep.subr.bf16.mxu0 0
      %614 = vmatpush1.bf16.msra.mxu0 %v592
      %615 = vmatprep.subr.bf16.mxu0 0
      %616 = vmatpush1.bf16.msra.mxu0 %v591
      %617 = vmatprep.subr.bf16.mxu0 0
      %618 = vmatpush1.bf16.msra.mxu0 %v590
      %619 = vmatprep.subr.bf16.mxu0 0
      %620 = vmatpush1.bf16.msra.mxu0 %v589
      %621 = vmatprep.subr.bf16.mxu0 0
      %622 = vmatpush2.bf16.msra.mxu0 0
      %623 = vmatprep.subr.bf16.mxu0 0
      %624 = vmatpush2.bf16.msra.mxu0 0
      %625 = vmatprep.subr.bf16.mxu0 0
      %626 = vmatpush2.bf16.msra.mxu0 0
      %627 = vmatprep.subr.bf16.mxu0 0
      %628 = vmatpush2.bf16.msra.mxu0 0
      %629 = vmatprep.subr.bf16.mxu0 0
      %630 = vmatpush2.bf16.msra.mxu0 0
      %631 = vmatprep.subr.bf16.mxu0 0
      %632 = vmatpush2.bf16.msra.mxu0 0
      %633 = vmatprep.subr.bf16.mxu0 0
      %634 = vmatpush2.bf16.msra.mxu0 0
      %635 = vmatprep.subr.bf16.mxu0 0
      %636 = vmatpush2.bf16.msra.mxu0 0
      %637 = vmatprep.mubr.bf16.mxu0 0
      %638 = vmatmul.mubr.bf16.gmra.mxu0 %v526
      %v639 = vpop.f32.mrf.mxu0
      %v640 = vadd.f32 %v555, %v639
      %v641 = vpop.f32.mrf.mxu0
      %v642 = vpop.f32.mrf.mxu0
      %v643 = vadd.f32 %v555, %v642
      %v644 = vpop.f32.mrf.mxu0
      %645 = vmatprep.mubr.bf16.mxu0 0
      %646 = vmatmul.mubr.bf16.gmra.mxu0 %v527
      %v647 = vpop.f32.mrf.mxu0
      %v648 = vadd.f32 %v555, %v647
      %v649 = vpop.f32.mrf.mxu0
      %v650 = vpop.f32.mrf.mxu0
      %v651 = vadd.f32 %v555, %v650
      %v652 = vpop.f32.mrf.mxu0
      %653 = vmatprep.mubr.bf16.mxu0 0
      %654 = vmatmul.mubr.bf16.gmra.mxu0 %v528
      %v655 = vpop.f32.mrf.mxu0
      %v656 = vadd.f32 %v555, %v655
      %v657 = vpop.f32.mrf.mxu0
      %v658 = vpop.f32.mrf.mxu0
      %v659 = vadd.f32 %v555, %v658
      %v660 = vpop.f32.mrf.mxu0
      %661 = vmatprep.mubr.bf16.mxu0 0
      %662 = vmatmul.mubr.bf16.gmra.mxu0 %v529
      %v663 = vpop.f32.mrf.mxu0
      %v664 = vadd.f32 %v555, %v663
      %v665 = vpop.f32.mrf.mxu0
      %v666 = vpop.f32.mrf.mxu0
      %v667 = vadd.f32 %v555, %v666
      %v668 = vpop.f32.mrf.mxu0
      %669 = vmatprep.mubr.bf16.mxu0 0
      %670 = vmatmul.mubr.bf16.gmra.mxu0 %v530
      %v671 = vpop.f32.mrf.mxu0
      %v672 = vadd.f32 %v555, %v671
      %v673 = vpop.f32.mrf.mxu0
      %v674 = vpop.f32.mrf.mxu0
      %v675 = vadd.f32 %v555, %v674
      %v676 = vpop.f32.mrf.mxu0
      %677 = vmatprep.mubr.bf16.mxu0 0
      %678 = vmatmul.mubr.bf16.gmra.mxu0 %v531
      %v679 = vpop.f32.mrf.mxu0
      %v680 = vadd.f32 %v555, %v679
      %v681 = vpop.f32.mrf.mxu0
      %v682 = vpop.f32.mrf.mxu0
      %v683 = vadd.f32 %v555, %v682
      %v684 = vpop.f32.mrf.mxu0
      %685 = vmatprep.mubr.bf16.mxu0 0
      %686 = vmatmul.mubr.bf16.gmra.mxu0 %v532
      %v687 = vpop.f32.mrf.mxu0
      %v688 = vadd.f32 %v555, %v687
      %v689 = vpop.f32.mrf.mxu0
      %v690 = vpop.f32.mrf.mxu0
      %v691 = vadd.f32 %v555, %v690
      %v692 = vpop.f32.mrf.mxu0
      %693 = vmatprep.mubr.bf16.mxu0 0
      %694 = vmatmul.mubr.bf16.gmra.mxu0 %v533
      %v695 = vpop.f32.mrf.mxu0
      %v696 = vadd.f32 %v555, %v695
      %v697 = vpop.f32.mrf.mxu0
      %v698 = vpop.f32.mrf.mxu0
      %v699 = vadd.f32 %v555, %v698
      %v700 = vpop.f32.mrf.mxu0
      %701 = vdwg.mxu0
      %v702 = vmax.f32 %v640, 0.0
      %v703 = vmax.f32 %v643, 0.0
      %v704 = vmax.f32 %v648, 0.0
      %v705 = vmax.f32 %v651, 0.0
      %v706 = vmax.f32 %v656, 0.0
      %v707 = vmax.f32 %v659, 0.0
      %v708 = vmax.f32 %v664, 0.0
      %v709 = vmax.f32 %v667, 0.0
      %v710 = vmax.f32 %v672, 0.0
      %v711 = vmax.f32 %v675, 0.0
      %v712 = vmax.f32 %v680, 0.0
      %v713 = vmax.f32 %v683, 0.0
      %v714 = vmax.f32 %v688, 0.0
      %v715 = vmax.f32 %v691, 0.0
      %v716 = vmax.f32 %v696, 0.0
      %v717 = vmax.f32 %v699, 0.0
      %v718 = vpack.c.bf16 %v703, %v702
      %v719 = vpack.c.bf16 %v705, %v704
      %v720 = vpack.c.bf16 %v707, %v706
      %v721 = vpack.c.bf16 %v709, %v708
      %v722 = vpack.c.bf16 %v711, %v710
      %v723 = vpack.c.bf16 %v713, %v712
      %v724 = vpack.c.bf16 %v715, %v714
      %v725 = vpack.c.bf16 %v717, %v716
      %v734 = vunpack.c.l.b16 %v718
      %v735 = vunpack.c.h.b16 %v718
      %v736 = vunpack.c.l.b16 %v719
      %v737 = vunpack.c.h.b16 %v719
      %v738 = vunpack.c.l.b16 %v720
      %v739 = vunpack.c.h.b16 %v720
      %v740 = vunpack.c.l.b16 %v721
      %v741 = vunpack.c.h.b16 %v721
      %v742 = vunpack.c.l.b16 %v722
      %v743 = vunpack.c.h.b16 %v722
      %v744 = vunpack.c.l.b16 %v723
      %v745 = vunpack.c.h.b16 %v723
      %v746 = vunpack.c.l.b16 %v724
      %v747 = vunpack.c.h.b16 %v724
      %v748 = vunpack.c.l.b16 %v725
      %v749 = vunpack.c.h.b16 %v725
      %v750 = vpack.c.b16 %v734, %v734
      %v751 = vpack.c.b16 %v735, %v735
      %v752 = vpack.c.b16 %v736, %v736
      %v753 = vpack.c.b16 %v737, %v737
      %v754 = vpack.c.b16 %v738, %v738
      %v755 = vpack.c.b16 %v739, %v739
      %v756 = vpack.c.b16 %v740, %v740
      %v757 = vpack.c.b16 %v741, %v741
      %v758 = vpack.c.b16 %v742, %v742
      %v759 = vpack.c.b16 %v743, %v743
      %v760 = vpack.c.b16 %v744, %v744
      %v761 = vpack.c.b16 %v745, %v745
      %v762 = vpack.c.b16 %v746, %v746
      %v763 = vpack.c.b16 %v747, %v747
      %v764 = vpack.c.b16 %v748, %v748
      %v765 = vpack.c.b16 %v749, %v749
      %782 = vst [vmem:[%s202] sm:$0xf] %v750
      %783 = vst [vmem:[%s202 + $0x4] sm:$0xf] %v751
      %784 = vst [vmem:[%s202 + $0x8] sm:$0xf] %v752
      %785 = vst [vmem:[%s202 + $0xc] sm:$0xf] %v753
      %786 = vst [vmem:[%s202 + $0x10] sm:$0xf] %v754
      %787 = vst [vmem:[%s202 + $0x14] sm:$0xf] %v755
      %788 = vst [vmem:[%s202 + $0x18] sm:$0xf] %v756
      %789 = vst [vmem:[%s202 + $0x1c] sm:$0xf] %v757
      %790 = vst [vmem:[%s202 + $0x20] sm:$0xf] %v758
      %791 = vst [vmem:[%s202 + $0x24] sm:$0xf] %v759
      %792 = vst [vmem:[%s202 + $0x28] sm:$0xf] %v760
      %793 = vst [vmem:[%s202 + $0x2c] sm:$0xf] %v761
      %794 = vst [vmem:[%s202 + $0x30] sm:$0xf] %v762
      %795 = vst [vmem:[%s202 + $0x34] sm:$0xf] %v763
      %796 = vst [vmem:[%s202 + $0x38] sm:$0xf] %v764
      %797 = vst [vmem:[%s202 + $0x3c] sm:$0xf] %v765
      %s798 = smul.u32 16, %s15
      %p799 = scmp.lt.s32.totalorder %s798, 31
      %s800 = scalar_select %p799, %s798, 31
      %s801 = smul.addr %s800, 4
      %s802 = scalar_lea.vmem %s4, %s801
      // Predicated region
      $region37: #{gcn_forward.4} parent=35 // pred_check
        %p803 = pneg %p122
      $region38: #{gcn_forward.4} parent=35 // pred_check_branch
        %805 = sbr.rel (%p803) target = $region40
      $region39: #{gcn_forward.4} parent=35 // pred_region
        %s806 = smul.u32 16, %s15
      $region40: #{gcn_forward.4} parent=35 // pred_fallthru
        _
    $region36: #{gcn_forward.4} parent=5 // pred_fallthru
      _
    %p807 = scmp.le.s32.totalorder 2, %s10
    // Predicated region
    $region41: #{gcn_forward.4} parent=5 // pred_check
      %p808 = pneg %p807
    $region42: #{gcn_forward.4} parent=5 // pred_check_branch
      %810 = sbr.rel (%p808) target = $region44
    $region43: #{gcn_forward.4} parent=5 // pred_region
      %s811 = ssub.s32 %s10, 2
      // Predicated region
      $region45: #{gcn_forward.4} parent=43 // pred_check
        %p812 = pneg %p128
      $region46: #{gcn_forward.4} parent=43 // pred_check_branch
        %814 = sbr.rel (%p812) target = $region48
      $region47: #{gcn_forward.4} parent=43 // pred_region
        %s815 = smul.u32 16, %s16
        %p816 = scmp.lt.s32.totalorder %s815, 31
        %s817 = scalar_select %p816, %s815, 31
        %s818 = smul.addr %s817, 4
        %s819 = scalar_lea.vmem %s4, %s818
      $region48: #{gcn_forward.4} parent=43 // pred_fallthru
        _
    $region44: #{gcn_forward.4} parent=5 // pred_fallthru
      _
  $region6: #{gcn_forward.4} parent=0 // loop_footer
    %s14 = sadd.s32 1, %s10
  $region7: #{gcn_forward.4} parent=0 // loop_footer_branch
    %9 = sbr.rel target = $region3
  $region8: #{gcn_forward.4} parent=0 // loop_exit
    _

// kernel: gcn_forward.7
$region0: #{gcn_forward.7}
  #allocation0 [shape = 'u32[]', space=smem, size = 0x4, offset = 0x4, fixed_abs, tag = 'smem constant byte address 0x4 - core index']
  #allocation1 [shape = 'u32[144,128]{1,0:T(1,128)}', space=vmem, size = 0x12000, scoped, tag = 'internal scratch']
  %s0 = inlined_call_operand.vmem [shape: bf16[256,256], index: 0, kind: input, shape index: {}]
  %s1 = inlined_call_operand.vmem [shape: bf16[256,128], index: 1, kind: input, shape index: {}]
  %s2 = inlined_call_operand.vmem [shape: f32[1,128], index: 2, kind: input, shape index: {}]
  %s3 = inlined_call_operand.vmem [shape: f32[256,128], index: 3, kind: output, shape index: {}]
  %s4 = sld [smem:[#allocation0]]
  $region45: #{gcn_forward.7} parent=0
    _
  %s6 = ssub.s32 1, %s4
  %s7 = scalar_select 0, %s6, %s4
  loop: start=0, step=1, limit=4
  $region2: #{gcn_forward.7} parent=0 // loop_pre_header
    _
  $region3: #{gcn_forward.7} parent=0 // loop_header
    %s9 = sphi 0, %s13
    %p10 = scmp.ge.s32.totalorder %s9, 4
    %s19 = sphi 0, %s21
    %s22 = sphi 0, %s19
    %s23 = sphi 0, %s22
    %s39 = sphi 0, %s23
    %s43 = sphi 0, %s43
    %s45 = sphi 0, %s43
    %s46 = sphi 0, %s45
    %s60 = sphi 0, %s46
    %s64 = sphi 0, %s64
    %s66 = sphi 0, %s64
    %s67 = sphi 0, %s66
    %s81 = sphi 0, %s67
    %s87 = sphi 0, %s89
    %s90 = sphi 0, %s87
    %s91 = sphi 0, %s90
    %s107 = sphi 0, %s91
  $region4: #{gcn_forward.7} parent=0 // loop_header_branch
    %12 = sbr.rel (%p10) target = $region8
  $region5: #{gcn_forward.7} parent=0 // loop_body
    %s14 = ssub.s32 %s9, 1
    %s15 = ssub.s32 %s9, 2
    %s16 = sadd.s32 %s9, 1
    %s17 = ssub.s32 %s9, %s16
    %p18 = scmp.eq.s32.totalorder %s17, 0
    %s20 = sadd.s32 %s19, 1
    %s21 = scalar_select %p18, %s19, %s20
    %p24 = pneg %p18
    %p25 = scmp.eq.s32.totalorder %s9, 1
    %p26 = por %p24, %p25
    %p27 = scmp.ne.s32.totalorder %s19, %s22
    %p28 = scmp.eq.s32.totalorder %s9, 0
    %p29 = por %p27, %p28
    %p30 = scmp.ne.s32.totalorder %s19, %s22
    %p31 = scmp.eq.s32.totalorder %s14, 1
    %p32 = por %p30, %p31
    %p33 = scmp.ne.s32.totalorder %s22, %s23
    %p34 = scmp.eq.s32.totalorder %s14, 0
    %p35 = por %p33, %p34
    %p36 = scmp.ne.s32.totalorder %s22, %s23
    %p37 = scmp.eq.s32.totalorder %s15, 1
    %p38 = por %p36, %p37
    %p40 = scmp.ne.s32.totalorder %s23, %s39
    %p41 = scmp.eq.s32.totalorder %s15, 0
    %p42 = por %p40, %p41
    %s44 = sadd.s32 %s43, 1
    %p47 = scmp.eq.s32.totalorder %s9, 1
    %p48 = scmp.ne.s32.totalorder %s43, %s45
    %p49 = scmp.eq.s32.totalorder %s9, 0
    %p50 = por %p48, %p49
    %p51 = scmp.ne.s32.totalorder %s43, %s45
    %p52 = scmp.eq.s32.totalorder %s14, 1
    %p53 = por %p51, %p52
    %p54 = scmp.ne.s32.totalorder %s45, %s46
    %p55 = scmp.eq.s32.totalorder %s14, 0
    %p56 = por %p54, %p55
    %p57 = scmp.ne.s32.totalorder %s45, %s46
    %p58 = scmp.eq.s32.totalorder %s15, 1
    %p59 = por %p57, %p58
    %p61 = scmp.ne.s32.totalorder %s46, %s60
    %p62 = scmp.eq.s32.totalorder %s15, 0
    %p63 = por %p61, %p62
    %s65 = sadd.s32 %s64, 1
    %p68 = scmp.eq.s32.totalorder %s9, 1
    %p69 = scmp.ne.s32.totalorder %s64, %s66
    %p70 = scmp.eq.s32.totalorder %s9, 0
    %p71 = por %p69, %p70
    %p72 = scmp.ne.s32.totalorder %s64, %s66
    %p73 = scmp.eq.s32.totalorder %s14, 1
    %p74 = por %p72, %p73
    %p75 = scmp.ne.s32.totalorder %s66, %s67
    %p76 = scmp.eq.s32.totalorder %s14, 0
    %p77 = por %p75, %p76
    %p78 = scmp.ne.s32.totalorder %s66, %s67
    %p79 = scmp.eq.s32.totalorder %s15, 1
    %p80 = por %p78, %p79
    %p82 = scmp.ne.s32.totalorder %s67, %s81
    %p83 = scmp.eq.s32.totalorder %s15, 0
    %p84 = por %p82, %p83
    %s85 = ssub.s32 %s9, %s16
    %p86 = scmp.eq.s32.totalorder %s85, 0
    %s88 = sadd.s32 %s87, 1
    %s89 = scalar_select %p86, %s87, %s88
    %p92 = pneg %p86
    %p93 = scmp.eq.s32.totalorder %s9, 1
    %p94 = por %p92, %p93
    %p95 = scmp.ne.s32.totalorder %s87, %s90
    %p96 = scmp.eq.s32.totalorder %s9, 0
    %p97 = por %p95, %p96
    %p98 = scmp.ne.s32.totalorder %s87, %s90
    %p99 = scmp.eq.s32.totalorder %s14, 1
    %p100 = por %p98, %p99
    %p101 = scmp.ne.s32.totalorder %s90, %s91
    %p102 = scmp.eq.s32.totalorder %s14, 0
    %p103 = por %p101, %p102
    %p104 = scmp.ne.s32.totalorder %s90, %s91
    %p105 = scmp.eq.s32.totalorder %s15, 1
    %p106 = por %p104, %p105
    %p108 = scmp.ne.s32.totalorder %s91, %s107
    %p109 = scmp.eq.s32.totalorder %s15, 0
    %p110 = por %p108, %p109
    %p111 = scmp.le.s32.totalorder 1, %s9
    %p112 = scmp.lt.s32.totalorder %s9, 3
    %p113 = pnand %p111, %p112
    %p114 = pneg %p113
    // Predicated region
    $region9: #{gcn_forward.7} parent=5 // pred_check
      _
    $region10: #{gcn_forward.7} parent=5 // pred_check_branch
      %116 = sbr.rel (%p113) target = $region12
    $region11: #{gcn_forward.7} parent=5 // pred_region
      %s117 = ssub.s32 %s9, 1
      // Predicated region
      $region13: #{gcn_forward.7} parent=11 // pred_check
        %p118 = pneg %p56
      $region14: #{gcn_forward.7} parent=11 // pred_check_branch
        %120 = sbr.rel (%p118) target = $region16
      $region15: #{gcn_forward.7} parent=11 // pred_region
        _
      $region16: #{gcn_forward.7} parent=11 // pred_fallthru
        _
      // Predicated region
      $region17: #{gcn_forward.7} parent=11 // pred_check
        %p121 = pneg %p77
      $region18: #{gcn_forward.7} parent=11 // pred_check_branch
        %123 = sbr.rel (%p121) target = $region20
      $region19: #{gcn_forward.7} parent=11 // pred_region
        _
      $region20: #{gcn_forward.7} parent=11 // pred_fallthru
        _
    $region12: #{gcn_forward.7} parent=5 // pred_fallthru
      _
    %p124 = scmp.lt.s32.totalorder %s9, 2
    // Predicated region
    $region21: #{gcn_forward.7} parent=5 // pred_check
      %p125 = pneg %p124
    $region22: #{gcn_forward.7} parent=5 // pred_check_branch
      %127 = sbr.rel (%p125) target = $region24
    $region23: #{gcn_forward.7} parent=5 // pred_region
      // Predicated region
      $region25: #{gcn_forward.7} parent=23 // pred_check
        %p128 = pneg %p29
      $region26: #{gcn_forward.7} parent=23 // pred_check_branch
        %130 = sbr.rel (%p128) target = $region28
      $region27: #{gcn_forward.7} parent=23 // pred_region
        %s131 = smul.u32 16, %s9
        %p132 = scmp.lt.s32.totalorder %s131, 31
        %s133 = scalar_select %p132, %s131, 31
        %s134 = smul.addr %s133, 2
        %s135 = smul.addr %s134, 4
        %s136 = scalar_lea.vmem %s0, %s135
        %s137 = smul.u32 16, %s9
      $region28: #{gcn_forward.7} parent=23 // pred_fallthru
        _
    $region24: #{gcn_forward.7} parent=5 // pred_fallthru
      _
    %p138 = scmp.le.s32.totalorder 1, %s9
    %p139 = scmp.lt.s32.totalorder %s9, 3
    %p140 = pnand %p138, %p139
    %p141 = pneg %p140
    // Predicated region
    $region29: #{gcn_forward.7} parent=5 // pred_check
      _
    $region30: #{gcn_forward.7} parent=5 // pred_check_branch
      %143 = sbr.rel (%p140) target = $region32
    $region31: #{gcn_forward.7} parent=5 // pred_region
      %s144 = ssub.s32 %s9, 1
      %s145 = smul.u32 16, %s14
      %p146 = scmp.lt.s32.totalorder %s145, 31
      %s147 = scalar_select %p146, %s145, 31
      %s148 = smul.addr %s147, 2
      %s149 = smul.addr %s148, 4
      %s150 = scalar_lea.vmem %s0, %s149
      %p151 = pneg %p35
      %p152 = pneg %p32
      %p153 = pneg %p56
      %p154 = pneg %p53
      %p155 = pneg %p77
      %p156 = pneg %p74
      %p157 = pneg %p103
      %p158 = pneg %p100
      %s159 = smul.u32 16, %s14
      %p160 = scmp.lt.s32.totalorder %s159, 31
      %s161 = scalar_select %p160, %s159, 31
      %s162 = smul.addr %s161, 8
      %s163 = scalar_lea.vmem %s3, %s162
      %s164 = smul.u32 16, %s14
      %p165 = scmp.lt.s32.totalorder %s164, 31
      %s166 = scalar_select %p165, %s164, 31
      %s167 = smul.addr %s166, 2
      %s168 = smul.addr %s167, 4
      %s169 = scalar_lea.vmem %s0, %s168
      %s170 = smul.u32 16, %s14
      %s171 = smul.u32 16, %s14
      %p172 = scmp.lt.s32.totalorder %s171, 31
      %s173 = scalar_select %p172, %s171, 31
      %s174 = smul.addr %s173, 8
      %s175 = scalar_lea.vmem %s3, %s174
      %s176 = smul.u32 16, %s14
      %v178 = vld [vmem:[%s169] sm:$0xff]
      %v179 = vld [vmem:[%s169 + $0x8] sm:$0xff]
      %v180 = vld [vmem:[%s169 + $0x10] sm:$0xff]
      %v181 = vld [vmem:[%s169 + $0x18] sm:$0xff]
      %v182 = vld [vmem:[%s169 + $0x20] sm:$0xff]
      %v183 = vld [vmem:[%s169 + $0x28] sm:$0xff]
      %v184 = vld [vmem:[%s169 + $0x30] sm:$0xff]
      %v185 = vld [vmem:[%s169 + $0x38] sm:$0xff]
      %v186 = vld [vmem:[%s169 + $0x40] sm:$0xff]
      %v187 = vld [vmem:[%s169 + $0x48] sm:$0xff]
      %v188 = vld [vmem:[%s169 + $0x50] sm:$0xff]
      %v189 = vld [vmem:[%s169 + $0x58] sm:$0xff]
      %v190 = vld [vmem:[%s169 + $0x60] sm:$0xff]
      %v191 = vld [vmem:[%s169 + $0x68] sm:$0xff]
      %v192 = vld [vmem:[%s169 + $0x70] sm:$0xff]
      %v193 = vld [vmem:[%s169 + $0x78] sm:$0xff]
      %v194 = vld [vmem:[%s1] sm:$0xf]
      %v195 = vld [vmem:[%s1 + $0x4] sm:$0xf]
      %v196 = vld [vmem:[%s1 + $0x8] sm:$0xf]
      %v197 = vld [vmem:[%s1 + $0xc] sm:$0xf]
      %v198 = vld [vmem:[%s1 + $0x10] sm:$0xf]
      %v199 = vld [vmem:[%s1 + $0x14] sm:$0xf]
      %v200 = vld [vmem:[%s1 + $0x18] sm:$0xf]
      %v201 = vld [vmem:[%s1 + $0x1c] sm:$0xf]
      %v202 = vld [vmem:[%s1 + $0x20] sm:$0xf]
      %v203 = vld [vmem:[%s1 + $0x24] sm:$0xf]
      %v204 = vld [vmem:[%s1 + $0x28] sm:$0xf]
      %v205 = vld [vmem:[%s1 + $0x2c] sm:$0xf]
      %v206 = vld [vmem:[%s1 + $0x30] sm:$0xf]
      %v207 = vld [vmem:[%s1 + $0x34] sm:$0xf]
      %v208 = vld [vmem:[%s1 + $0x38] sm:$0xf]
      %v209 = vld [vmem:[%s1 + $0x3c] sm:$0xf]
      %v210 = vld [vmem:[%s1 + $0x40] sm:$0xf]
      %v211 = vld [vmem:[%s1 + $0x44] sm:$0xf]
      %v212 = vld [vmem:[%s1 + $0x48] sm:$0xf]
      %v213 = vld [vmem:[%s1 + $0x4c] sm:$0xf]
      %v214 = vld [vmem:[%s1 + $0x50] sm:$0xf]
      %v215 = vld [vmem:[%s1 + $0x54] sm:$0xf]
      %v216 = vld [vmem:[%s1 + $0x58] sm:$0xf]
      %v217 = vld [vmem:[%s1 + $0x5c] sm:$0xf]
      %v218 = vld [vmem:[%s1 + $0x60] sm:$0xf]
      %v219 = vld [vmem:[%s1 + $0x64] sm:$0xf]
      %v220 = vld [vmem:[%s1 + $0x68] sm:$0xf]
      %v221 = vld [vmem:[%s1 + $0x6c] sm:$0xf]
      %v222 = vld [vmem:[%s1 + $0x70] sm:$0xf]
      %v223 = vld [vmem:[%s1 + $0x74] sm:$0xf]
      %v224 = vld [vmem:[%s1 + $0x78] sm:$0xf]
      %v225 = vld [vmem:[%s1 + $0x7c] sm:$0xf]
      %v226 = vld [vmem:[%s2] sm:$0x1]
      %v228 = vlaneseq
      %v229 = vshrl.u32 %v228, 7
      %v230 = vsub.s32 0, %v229
      %v231 = vrot.slane %v226, %v230
      %v249 = vunpack.c.l.b16 %v178
      %v250 = vunpack.c.h.b16 %v178
      %v251 = vunpack.c.l.b16 %v179
      %v252 = vunpack.c.h.b16 %v179
      %v253 = vunpack.c.l.b16 %v180
      %v254 = vunpack.c.h.b16 %v180
      %v255 = vunpack.c.l.b16 %v181
      %v256 = vunpack.c.h.b16 %v181
      %v257 = vunpack.c.l.b16 %v182
      %v258 = vunpack.c.h.b16 %v182
      %v259 = vunpack.c.l.b16 %v183
      %v260 = vunpack.c.h.b16 %v183
      %v261 = vunpack.c.l.b16 %v184
      %v262 = vunpack.c.h.b16 %v184
      %v263 = vunpack.c.l.b16 %v185
      %v264 = vunpack.c.h.b16 %v185
      %v265 = vunpack.c.l.b16 %v186
      %v266 = vunpack.c.h.b16 %v186
      %v267 = vunpack.c.l.b16 %v187
      %v268 = vunpack.c.h.b16 %v187
      %v269 = vunpack.c.l.b16 %v188
      %v270 = vunpack.c.h.b16 %v188
      %v271 = vunpack.c.l.b16 %v189
      %v272 = vunpack.c.h.b16 %v189
      %v273 = vunpack.c.l.b16 %v190
      %v274 = vunpack.c.h.b16 %v190
      %v275 = vunpack.c.l.b16 %v191
      %v276 = vunpack.c.h.b16 %v191
      %v277 = vunpack.c.l.b16 %v192
      %v278 = vunpack.c.h.b16 %v192
      %v279 = vunpack.c.l.b16 %v193
      %v280 = vunpack.c.h.b16 %v193
      %v281 = vpack.c.b16 %v251, %v249
      %v282 = vpack.c.b16 %v252, %v250
      %v283 = vpack.c.b16 %v255, %v253
      %v284 = vpack.c.b16 %v256, %v254
      %v285 = vpack.c.b16 %v259, %v257
      %v286 = vpack.c.b16 %v260, %v258
      %v287 = vpack.c.b16 %v263, %v261
      %v288 = vpack.c.b16 %v264, %v262
      %v289 = vpack.c.b16 %v267, %v265
      %v290 = vpack.c.b16 %v268, %v266
      %v291 = vpack.c.b16 %v271, %v269
      %v292 = vpack.c.b16 %v272, %v270
      %v293 = vpack.c.b16 %v275, %v273
      %v294 = vpack.c.b16 %v276, %v274
      %v295 = vpack.c.b16 %v279, %v277
      %v296 = vpack.c.b16 %v280, %v278
      %v345 = vunpack.c.l.b16 %v194
      %v346 = vunpack.c.l.b16 %v195
      %v347 = vunpack.c.l.b16 %v196
      %v348 = vunpack.c.l.b16 %v197
      %v349 = vunpack.c.l.b16 %v198
      %v350 = vunpack.c.l.b16 %v199
      %v351 = vunpack.c.l.b16 %v200
      %v352 = vunpack.c.l.b16 %v201
      %v353 = vunpack.c.l.b16 %v202
      %v354 = vunpack.c.l.b16 %v203
      %v355 = vunpack.c.l.b16 %v204
      %v356 = vunpack.c.l.b16 %v205
      %v357 = vunpack.c.l.b16 %v206
      %v358 = vunpack.c.l.b16 %v207
      %v359 = vunpack.c.l.b16 %v208
      %v360 = vunpack.c.l.b16 %v209
      %v361 = vunpack.c.l.b16 %v210
      %v362 = vunpack.c.l.b16 %v211
      %v363 = vunpack.c.l.b16 %v212
      %v364 = vunpack.c.l.b16 %v213
      %v365 = vunpack.c.l.b16 %v214
      %v366 = vunpack.c.l.b16 %v215
      %v367 = vunpack.c.l.b16 %v216
      %v368 = vunpack.c.l.b16 %v217
      %v369 = vunpack.c.l.b16 %v218
      %v370 = vunpack.c.l.b16 %v219
      %v371 = vunpack.c.l.b16 %v220
      %v372 = vunpack.c.l.b16 %v221
      %v373 = vunpack.c.l.b16 %v222
      %v374 = vunpack.c.l.b16 %v223
      %v375 = vunpack.c.l.b16 %v224
      %v376 = vunpack.c.l.b16 %v225
      %v377 = vpack.c.b16 %v346, %v345
      %v378 = vpack.c.b16 %v348, %v347
      %v379 = vpack.c.b16 %v350, %v349
      %v380 = vpack.c.b16 %v352, %v351
      %v381 = vpack.c.b16 %v354, %v353
      %v382 = vpack.c.b16 %v356, %v355
      %v383 = vpack.c.b16 %v358, %v357
      %v384 = vpack.c.b16 %v360, %v359
      %v385 = vpack.c.b16 %v362, %v361
      %v386 = vpack.c.b16 %v364, %v363
      %v387 = vpack.c.b16 %v366, %v365
      %v388 = vpack.c.b16 %v368, %v367
      %v389 = vpack.c.b16 %v370, %v369
      %v390 = vpack.c.b16 %v372, %v371
      %v391 = vpack.c.b16 %v374, %v373
      %v392 = vpack.c.b16 %v376, %v375
      %409 = vmatprep.subr.bf16.mxu0 0
      %410 = vmatpush1.bf16.msra.mxu0 %v384
      %411 = vmatprep.subr.bf16.mxu0 0
      %412 = vmatpush1.bf16.msra.mxu0 %v383
      %413 = vmatprep.subr.bf16.mxu0 0
      %414 = vmatpush1.bf16.msra.mxu0 %v382
      %415 = vmatprep.subr.bf16.mxu0 0
      %416 = vmatpush1.bf16.msra.mxu0 %v381
      %417 = vmatprep.subr.bf16.mxu0 0
      %418 = vmatpush1.bf16.msra.mxu0 %v380
      %419 = vmatprep.subr.bf16.mxu0 0
      %420 = vmatpush1.bf16.msra.mxu0 %v379
      %421 = vmatprep.subr.bf16.mxu0 0
      %422 = vmatpush1.bf16.msra.mxu0 %v378
      %423 = vmatprep.subr.bf16.mxu0 0
      %424 = vmatpush1.bf16.msra.mxu0 %v377
      %425 = vmatprep.subr.bf16.mxu0 0
      %426 = vmatpush2.bf16.msra.mxu0 %v392
      %427 = vmatprep.subr.bf16.mxu0 0
      %428 = vmatpush2.bf16.msra.mxu0 %v391
      %429 = vmatprep.subr.bf16.mxu0 0
      %430 = vmatpush2.bf16.msra.mxu0 %v390
      %431 = vmatprep.subr.bf16.mxu0 0
      %432 = vmatpush2.bf16.msra.mxu0 %v389
      %433 = vmatprep.subr.bf16.mxu0 0
      %434 = vmatpush2.bf16.msra.mxu0 %v388
      %435 = vmatprep.subr.bf16.mxu0 0
      %436 = vmatpush2.bf16.msra.mxu0 %v387
      %437 = vmatprep.subr.bf16.mxu0 0
      %438 = vmatpush2.bf16.msra.mxu0 %v386
      %439 = vmatprep.subr.bf16.mxu0 0
      %440 = vmatpush2.bf16.msra.mxu0 %v385
      %441 = vmatprep.mubr.bf16.mxu0 %v282
      %442 = vmatmul.mubr.bf16.gmra.mxu0 %v281
      %v443 = vpop.f32.mrf.mxu0
      %v444 = vadd.f32 %v231, %v443
      %v445 = vpop.f32.mrf.mxu0
      %v446 = vpop.f32.mrf.mxu0
      %v447 = vadd.f32 %v231, %v446
      %v448 = vpop.f32.mrf.mxu0
      %449 = vmatprep.mubr.bf16.mxu0 %v284
      %450 = vmatmul.mubr.bf16.gmra.mxu0 %v283
      %v451 = vpop.f32.mrf.mxu0
      %v452 = vadd.f32 %v231, %v451
      %v453 = vpop.f32.mrf.mxu0
      %v454 = vpop.f32.mrf.mxu0
      %v455 = vadd.f32 %v231, %v454
      %v456 = vpop.f32.mrf.mxu0
      %457 = vmatprep.mubr.bf16.mxu0 %v286
      %458 = vmatmul.mubr.bf16.gmra.mxu0 %v285
      %v459 = vpop.f32.mrf.mxu0
      %v460 = vadd.f32 %v231, %v459
      %v461 = vpop.f32.mrf.mxu0
      %v462 = vpop.f32.mrf.mxu0
      %v463 = vadd.f32 %v231, %v462
      %v464 = vpop.f32.mrf.mxu0
      %465 = vmatprep.mubr.bf16.mxu0 %v288
      %466 = vmatmul.mubr.bf16.gmra.mxu0 %v287
      %v467 = vpop.f32.mrf.mxu0
      %v468 = vadd.f32 %v231, %v467
      %v469 = vpop.f32.mrf.mxu0
      %v470 = vpop.f32.mrf.mxu0
      %v471 = vadd.f32 %v231, %v470
      %v472 = vpop.f32.mrf.mxu0
      %473 = vmatprep.mubr.bf16.mxu0 %v290
      %474 = vmatmul.mubr.bf16.gmra.mxu0 %v289
      %v475 = vpop.f32.mrf.mxu0
      %v476 = vadd.f32 %v231, %v475
      %v477 = vpop.f32.mrf.mxu0
      %v478 = vpop.f32.mrf.mxu0
      %v479 = vadd.f32 %v231, %v478
      %v480 = vpop.f32.mrf.mxu0
      %481 = vmatprep.mubr.bf16.mxu0 %v292
      %482 = vmatmul.mubr.bf16.gmra.mxu0 %v291
      %v483 = vpop.f32.mrf.mxu0
      %v484 = vadd.f32 %v231, %v483
      %v485 = vpop.f32.mrf.mxu0
      %v486 = vpop.f32.mrf.mxu0
      %v487 = vadd.f32 %v231, %v486
      %v488 = vpop.f32.mrf.mxu0
      %489 = vmatprep.mubr.bf16.mxu0 %v294
      %490 = vmatmul.mubr.bf16.gmra.mxu0 %v293
      %v491 = vpop.f32.mrf.mxu0
      %v492 = vadd.f32 %v231, %v491
      %v493 = vpop.f32.mrf.mxu0
      %v494 = vpop.f32.mrf.mxu0
      %v495 = vadd.f32 %v231, %v494
      %v496 = vpop.f32.mrf.mxu0
      %497 = vmatprep.mubr.bf16.mxu0 %v296
      %498 = vmatmul.mubr.bf16.gmra.mxu0 %v295
      %v499 = vpop.f32.mrf.mxu0
      %v500 = vadd.f32 %v231, %v499
      %v501 = vpop.f32.mrf.mxu0
      %v502 = vpop.f32.mrf.mxu0
      %v503 = vadd.f32 %v231, %v502
      %v504 = vpop.f32.mrf.mxu0
      %505 = vdwg.mxu0
      %v506 = vlaneseq
      %v507 = vand.u32 %v506, 127
      %vm508 = vcmp.lt.s32.totalorder %v507, 8
      %v509 = vsel %vm508, %v444, -1e+30
      %v510 = vsel %vm508, %v447, -1e+30
      %v511 = vsel %vm508, %v452, -1e+30
      %v512 = vsel %vm508, %v455, -1e+30
      %v513 = vsel %vm508, %v460, -1e+30
      %v514 = vsel %vm508, %v463, -1e+30
      %v515 = vsel %vm508, %v468, -1e+30
      %v516 = vsel %vm508, %v471, -1e+30
      %v517 = vsel %vm508, %v476, -1e+30
      %v518 = vsel %vm508, %v479, -1e+30
      %v519 = vsel %vm508, %v484, -1e+30
      %v520 = vsel %vm508, %v487, -1e+30
      %v521 = vsel %vm508, %v492, -1e+30
      %v522 = vsel %vm508, %v495, -1e+30
      %v523 = vsel %vm508, %v500, -1e+30
      %v524 = vsel %vm508, %v503, -1e+30
      %525 = vmax.xlane.f32.xlu0 %v509
      %v526 = vpop.xlane.xlu0 %525
      %527 = vmax.xlane.f32.xlu0 %v510
      %v528 = vpop.xlane.xlu0 %527
      %529 = vmax.xlane.f32.xlu0 %v511
      %v530 = vpop.xlane.xlu0 %529
      %531 = vmax.xlane.f32.xlu0 %v512
      %v532 = vpop.xlane.xlu0 %531
      %533 = vmax.xlane.f32.xlu0 %v513
      %v534 = vpop.xlane.xlu0 %533
      %535 = vmax.xlane.f32.xlu0 %v514
      %v536 = vpop.xlane.xlu0 %535
      %537 = vmax.xlane.f32.xlu0 %v515
      %v538 = vpop.xlane.xlu0 %537
      %539 = vmax.xlane.f32.xlu0 %v516
      %v540 = vpop.xlane.xlu0 %539
      %541 = vmax.xlane.f32.xlu0 %v517
      %v542 = vpop.xlane.xlu0 %541
      %543 = vmax.xlane.f32.xlu0 %v518
      %v544 = vpop.xlane.xlu0 %543
      %545 = vmax.xlane.f32.xlu0 %v519
      %v546 = vpop.xlane.xlu0 %545
      %547 = vmax.xlane.f32.xlu0 %v520
      %v548 = vpop.xlane.xlu0 %547
      %549 = vmax.xlane.f32.xlu0 %v521
      %v550 = vpop.xlane.xlu0 %549
      %551 = vmax.xlane.f32.xlu0 %v522
      %v552 = vpop.xlane.xlu0 %551
      %553 = vmax.xlane.f32.xlu0 %v523
      %v554 = vpop.xlane.xlu0 %553
      %555 = vmax.xlane.f32.xlu0 %v524
      %v556 = vpop.xlane.xlu0 %555
      %v557 = vsub.f32 %v509, %v526
      %v558 = vsub.f32 %v510, %v528
      %v559 = vsub.f32 %v511, %v530
      %v560 = vsub.f32 %v512, %v532
      %v561 = vsub.f32 %v513, %v534
      %v562 = vsub.f32 %v514, %v536
      %v563 = vsub.f32 %v515, %v538
      %v564 = vsub.f32 %v516, %v540
      %v565 = vsub.f32 %v517, %v542
      %v566 = vsub.f32 %v518, %v544
      %v567 = vsub.f32 %v519, %v546
      %v568 = vsub.f32 %v520, %v548
      %v569 = vsub.f32 %v521, %v550
      %v570 = vsub.f32 %v522, %v552
      %v571 = vsub.f32 %v523, %v554
      %v572 = vsub.f32 %v524, %v556
      %v573 = vmul.f32 %v557, 1.442695
      %v574 = vpow.pop %v573
      %v575 = vmul.f32 %v558, 1.442695
      %v576 = vpow.pop %v575
      %v577 = vmul.f32 %v559, 1.442695
      %v578 = vpow.pop %v577
      %v579 = vmul.f32 %v560, 1.442695
      %v580 = vpow.pop %v579
      %v581 = vmul.f32 %v561, 1.442695
      %v582 = vpow.pop %v581
      %v583 = vmul.f32 %v562, 1.442695
      %v584 = vpow.pop %v583
      %v585 = vmul.f32 %v563, 1.442695
      %v586 = vpow.pop %v585
      %v587 = vmul.f32 %v564, 1.442695
      %v588 = vpow.pop %v587
      %v589 = vmul.f32 %v565, 1.442695
      %v590 = vpow.pop %v589
      %v591 = vmul.f32 %v566, 1.442695
      %v592 = vpow.pop %v591
      %v593 = vmul.f32 %v567, 1.442695
      %v594 = vpow.pop %v593
      %v595 = vmul.f32 %v568, 1.442695
      %v596 = vpow.pop %v595
      %v597 = vmul.f32 %v569, 1.442695
      %v598 = vpow.pop %v597
      %v599 = vmul.f32 %v570, 1.442695
      %v600 = vpow.pop %v599
      %v601 = vmul.f32 %v571, 1.442695
      %v602 = vpow.pop %v601
      %v603 = vmul.f32 %v572, 1.442695
      %v604 = vpow.pop %v603
      %v605 = vsel %vm508, %v574, 0.0
      %v606 = vsel %vm508, %v576, 0.0
      %v607 = vsel %vm508, %v578, 0.0
      %v608 = vsel %vm508, %v580, 0.0
      %v609 = vsel %vm508, %v582, 0.0
      %v610 = vsel %vm508, %v584, 0.0
      %v611 = vsel %vm508, %v586, 0.0
      %v612 = vsel %vm508, %v588, 0.0
      %v613 = vsel %vm508, %v590, 0.0
      %v614 = vsel %vm508, %v592, 0.0
      %v615 = vsel %vm508, %v594, 0.0
      %v616 = vsel %vm508, %v596, 0.0
      %v617 = vsel %vm508, %v598, 0.0
      %v618 = vsel %vm508, %v600, 0.0
      %v619 = vsel %vm508, %v602, 0.0
      %v620 = vsel %vm508, %v604, 0.0
      %621 = vadd.xlane.f32.xlu0 %v605
      %v622 = vpop.xlane.xlu0 %621
      %623 = vadd.xlane.f32.xlu0 %v606
      %v624 = vpop.xlane.xlu0 %623
      %625 = vadd.xlane.f32.xlu0 %v607
      %v626 = vpop.xlane.xlu0 %625
      %627 = vadd.xlane.f32.xlu0 %v608
      %v628 = vpop.xlane.xlu0 %627
      %629 = vadd.xlane.f32.xlu0 %v609
      %v630 = vpop.xlane.xlu0 %629
      %631 = vadd.xlane.f32.xlu0 %v610
      %v632 = vpop.xlane.xlu0 %631
      %633 = vadd.xlane.f32.xlu0 %v611
      %v634 = vpop.xlane.xlu0 %633
      %635 = vadd.xlane.f32.xlu0 %v612
      %v636 = vpop.xlane.xlu0 %635
      %637 = vadd.xlane.f32.xlu0 %v613
      %v638 = vpop.xlane.xlu0 %637
      %639 = vadd.xlane.f32.xlu0 %v614
      %v640 = vpop.xlane.xlu0 %639
      %641 = vadd.xlane.f32.xlu0 %v615
      %v642 = vpop.xlane.xlu0 %641
      %643 = vadd.xlane.f32.xlu0 %v616
      %v644 = vpop.xlane.xlu0 %643
      %645 = vadd.xlane.f32.xlu0 %v617
      %v646 = vpop.xlane.xlu0 %645
      %647 = vadd.xlane.f32.xlu0 %v618
      %v648 = vpop.xlane.xlu0 %647
      %649 = vadd.xlane.f32.xlu0 %v619
      %v650 = vpop.xlane.xlu0 %649
      %651 = vadd.xlane.f32.xlu0 %v620
      %v652 = vpop.xlane.xlu0 %651
      %v653 = vlog2.pop %v622
      %v654 = vmul.f32 %v653, 0.6931472
      %v655 = vlog2.pop %v624
      %v656 = vmul.f32 %v655, 0.6931472
      %v657 = vlog2.pop %v626
      %v658 = vmul.f32 %v657, 0.6931472
      %v659 = vlog2.pop %v628
      %v660 = vmul.f32 %v659, 0.6931472
      %v661 = vlog2.pop %v630
      %v662 = vmul.f32 %v661, 0.6931472
      %v663 = vlog2.pop %v632
      %v664 = vmul.f32 %v663, 0.6931472
      %v665 = vlog2.pop %v634
      %v666 = vmul.f32 %v665, 0.6931472
      %v667 = vlog2.pop %v636
      %v668 = vmul.f32 %v667, 0.6931472
      %v669 = vlog2.pop %v638
      %v670 = vmul.f32 %v669, 0.6931472
      %v671 = vlog2.pop %v640
      %v672 = vmul.f32 %v671, 0.6931472
      %v673 = vlog2.pop %v642
      %v674 = vmul.f32 %v673, 0.6931472
      %v675 = vlog2.pop %v644
      %v676 = vmul.f32 %v675, 0.6931472
      %v677 = vlog2.pop %v646
      %v678 = vmul.f32 %v677, 0.6931472
      %v679 = vlog2.pop %v648
      %v680 = vmul.f32 %v679, 0.6931472
      %v681 = vlog2.pop %v650
      %v682 = vmul.f32 %v681, 0.6931472
      %v683 = vlog2.pop %v652
      %v684 = vmul.f32 %v683, 0.6931472
      %v685 = vsub.f32 %v557, %v654
      %v686 = vsub.f32 %v558, %v656
      %v687 = vsub.f32 %v559, %v658
      %v688 = vsub.f32 %v560, %v660
      %v689 = vsub.f32 %v561, %v662
      %v690 = vsub.f32 %v562, %v664
      %v691 = vsub.f32 %v563, %v666
      %v692 = vsub.f32 %v564, %v668
      %v693 = vsub.f32 %v565, %v670
      %v694 = vsub.f32 %v566, %v672
      %v695 = vsub.f32 %v567, %v674
      %v696 = vsub.f32 %v568, %v676
      %v697 = vsub.f32 %v569, %v678
      %v698 = vsub.f32 %v570, %v680
      %v699 = vsub.f32 %v571, %v682
      %v700 = vsub.f32 %v572, %v684
      %v701 = vsel %vm508, %v685, 0.0
      %v702 = vsel %vm508, %v686, 0.0
      %v703 = vsel %vm508, %v687, 0.0
      %v704 = vsel %vm508, %v688, 0.0
      %v705 = vsel %vm508, %v689, 0.0
      %v706 = vsel %vm508, %v690, 0.0
      %v707 = vsel %vm508, %v691, 0.0
      %v708 = vsel %vm508, %v692, 0.0
      %v709 = vsel %vm508, %v693, 0.0
      %v710 = vsel %vm508, %v694, 0.0
      %v711 = vsel %vm508, %v695, 0.0
      %v712 = vsel %vm508, %v696, 0.0
      %v713 = vsel %vm508, %v697, 0.0
      %v714 = vsel %vm508, %v698, 0.0
      %v715 = vsel %vm508, %v699, 0.0
      %v716 = vsel %vm508, %v700, 0.0
      %717 = vst [vmem:[%s175] sm:$0xff] %v701
      %718 = vst [vmem:[%s175 + $0x8] sm:$0xff] %v702
      %719 = vst [vmem:[%s175 + $0x10] sm:$0xff] %v703
      %720 = vst [vmem:[%s175 + $0x18] sm:$0xff] %v704
      %721 = vst [vmem:[%s175 + $0x20] sm:$0xff] %v705
      %722 = vst [vmem:[%s175 + $0x28] sm:$0xff] %v706
      %723 = vst [vmem:[%s175 + $0x30] sm:$0xff] %v707
      %724 = vst [vmem:[%s175 + $0x38] sm:$0xff] %v708
      %725 = vst [vmem:[%s175 + $0x40] sm:$0xff] %v709
      %726 = vst [vmem:[%s175 + $0x48] sm:$0xff] %v710
      %727 = vst [vmem:[%s175 + $0x50] sm:$0xff] %v711
      %728 = vst [vmem:[%s175 + $0x58] sm:$0xff] %v712
      %729 = vst [vmem:[%s175 + $0x60] sm:$0xff] %v713
      %730 = vst [vmem:[%s175 + $0x68] sm:$0xff] %v714
      %731 = vst [vmem:[%s175 + $0x70] sm:$0xff] %v715
      %732 = vst [vmem:[%s175 + $0x78] sm:$0xff] %v716
      %s733 = smul.u32 16, %s14
      %p734 = scmp.lt.s32.totalorder %s733, 31
      %s735 = scalar_select %p734, %s733, 31
      %s736 = smul.addr %s735, 8
      %s737 = scalar_lea.vmem %s3, %s736
      // Predicated region
      $region33: #{gcn_forward.7} parent=31 // pred_check
        %p738 = pneg %p100
      $region34: #{gcn_forward.7} parent=31 // pred_check_branch
        %740 = sbr.rel (%p738) target = $region36
      $region35: #{gcn_forward.7} parent=31 // pred_region
        %s741 = smul.u32 16, %s14
      $region36: #{gcn_forward.7} parent=31 // pred_fallthru
        _
    $region32: #{gcn_forward.7} parent=5 // pred_fallthru
      _
    %p742 = scmp.le.s32.totalorder 2, %s9
    // Predicated region
    $region37: #{gcn_forward.7} parent=5 // pred_check
      %p743 = pneg %p742
    $region38: #{gcn_forward.7} parent=5 // pred_check_branch
      %745 = sbr.rel (%p743) target = $region40
    $region39: #{gcn_forward.7} parent=5 // pred_region
      %s746 = ssub.s32 %s9, 2
      // Predicated region
      $region41: #{gcn_forward.7} parent=39 // pred_check
        %p747 = pneg %p106
      $region42: #{gcn_forward.7} parent=39 // pred_check_branch
        %749 = sbr.rel (%p747) target = $region44
      $region43: #{gcn_forward.7} parent=39 // pred_region
        %s750 = smul.u32 16, %s15
        %p751 = scmp.lt.s32.totalorder %s750, 31
        %s752 = scalar_select %p751, %s750, 31
        %s753 = smul.addr %s752, 8
        %s754 = scalar_lea.vmem %s3, %s753
      $region44: #{gcn_forward.7} parent=39 // pred_fallthru
        _
    $region40: #{gcn_forward.7} parent=5 // pred_fallthru
      _
  $region6: #{gcn_forward.7} parent=0 // loop_footer
    %s13 = sadd.s32 1, %s9
  $region7: #{gcn_forward.7} parent=0 // loop_footer_branch
    %8 = sbr.rel target = $region3
  $region8: #{gcn_forward.7} parent=0 // loop_exit
    _

</llo_original>
